<compile_context>
chip_gen: v6e
topology: v6e:2x2x1
jax: 0.10.0
libtpu: 0.0.40
codegen_flags: <defaults>
</compile_context>

<pallas_src>
import math

import jax
import jax.numpy as jnp
from jax.experimental import pallas as pl
from jax.experimental.pallas import tpu as pltpu

NEG_SLOPE = 0.01  # F.leaky_relu default negative slope


def _gat_kernel(hsrc_ref, htgt_ref, harc_ref,
                wsrc_ref, wtgt_ref, warc_ref, rmean_ref, out_ref):
    """One row-block: packed per-head scores -> leaky_relu -> per-row head mean."""
    # Packed rows: VMEM row p holds k original rows' features; the weights are
    # block-diagonal, so s[p, j*H + h] is the head-h score of original row k*p + j.
    s = jnp.dot(hsrc_ref[...].astype(jnp.float32), wsrc_ref[...],
                preferred_element_type=jnp.float32)
    s = s + jnp.dot(htgt_ref[...].astype(jnp.float32), wtgt_ref[...],
                    preferred_element_type=jnp.float32)
    s = s + jnp.dot(harc_ref[...].astype(jnp.float32), warc_ref[...],
                    preferred_element_type=jnp.float32)
    s = jnp.where(s >= 0, s, NEG_SLOPE * s)            # leaky_relu per head score
    # Head mean via matmul with R = kron(I_k, ones(H,1)/H): [P, k*H] @ [k*H, k].
    out_ref[...] = jnp.dot(s, rmean_ref[...],
                           preferred_element_type=jnp.float32).astype(out_ref.dtype)


def _round_up(x, m):
    return ((x + m - 1) // m) * m


def fold_weights(wsrc, wtgt, warc, attn):
    """Fold per-head projections into per-head score vectors.

    wsrc/wtgt: [H, in_dim, out_dim]; warc: [H, arc_dim, out_dim];
    attn: [H, 3*out_dim, 1].  Returns Vsrc [in_dim, H], Vtgt [in_dim, H],
    Varc [arc_dim, H] with V*[:, h] = W*_h @ a_h[segment].  Valid because
    leaky_relu acts on the scalar score after the whole linear chain.
    """
    out_dim = wsrc.shape[2]
    a = attn[..., 0].astype(jnp.float32)                       # [H, 3*out_dim]
    vsrc = jnp.einsum('hio,ho->ih', wsrc.astype(jnp.float32), a[:, 0:out_dim])
    vtgt = jnp.einsum('hio,ho->ih', wtgt.astype(jnp.float32), a[:, out_dim:2 * out_dim])
    varc = jnp.einsum('hio,ho->ih', warc.astype(jnp.float32), a[:, 2 * out_dim:3 * out_dim])
    return vsrc, vtgt, varc


def _pick_pack_factor(dims, num_heads, max_weight_bytes=4 << 20):
    """Rows packed k-at-a-time so k*d is a multiple of 128 (lane-dense tiles);
    k (a power of two <= 128) is capped so the block-diagonal weights stay small."""
    k = max(128 // math.gcd(int(d), 128) for d in dims)
    while k > 1 and (k * max(dims)) * (k * num_heads) * 4 > max_weight_bytes:
        k //= 2
    return k


def multi_head_gat(h_src, h_tgt, h_arc, wsrc, wtgt, warc, attn, *, block_n=8192):
    # Mirror the PyTorch module's input handling.
    if h_arc.ndim == 3:                       # arc.squeeze(1) in the reference code
        h_arc = jnp.squeeze(h_arc, axis=1)

    # Do NOT upcast floating activations in the wrapper (bf16 streams at half the
    # HBM bytes); the f32 cast happens on the VMEM tile inside the kernel.
    def _as_float(x):
        return x if jnp.issubdtype(x.dtype, jnp.floating) else x.astype(jnp.float32)
    h_src, h_tgt, h_arc = _as_float(h_src), _as_float(h_tgt), _as_float(h_arc)

    N, in_dim = h_src.shape
    arc_dim = h_arc.shape[1]
    num_heads = wsrc.shape[0]

    # 1) Fold projection @ attention vector -> [d, H] score vectors per stream.
    vsrc, vtgt, varc = fold_weights(wsrc, wtgt, warc, attn)

    # 2) Build packed (block-diagonal) weights and the head-mean matrix.
    k = _pick_pack_factor((in_dim, in_dim, arc_dim), num_heads)
    eye_k = jnp.eye(k, dtype=jnp.float32)
    wsrc_bd = jnp.kron(eye_k, vsrc)                                    # [k*in,  k*H]
    wtgt_bd = jnp.kron(eye_k, vtgt)                                    # [k*in,  k*H]
    warc_bd = jnp.kron(eye_k, varc)                                    # [k*arc, k*H]
    rmean = jnp.kron(eye_k, jnp.full((num_heads, 1), 1.0 / num_heads,
                                     jnp.float32))                     # [k*H, k]

    # 3) Row-block selection: multiple of k * sublane tile, ~even split of N so the
    #    zero-padded tail stays small.
    itemsize = min(h_src.dtype.itemsize, h_tgt.dtype.itemsize, h_arc.dtype.itemsize)
    sublane = {4: 8, 2: 16, 1: 32}.get(itemsize, 8)
    row_align = k * sublane
    steps = max(1, int(pl.cdiv(N, block_n)))
    if steps == 1 and N >= 16 * row_align:
        steps = 2                              # give v7x's second TensorCore work
    block = _round_up(max(1, int(pl.cdiv(N, steps))), row_align)
    steps = max(1, int(pl.cdiv(N, block)))
    n_pad = steps * block

    if n_pad != N:
        pad = ((0, n_pad - N), (0, 0))         # zero rows -> zero scores, sliced off
        h_src, h_tgt, h_arc = jnp.pad(h_src, pad), jnp.pad(h_tgt, pad), jnp.pad(h_arc, pad)

    # Free, contiguous row packing: [n_pad, d] -> [n_pad/k, k*d] (no data movement).
    hsrc_p = h_src.reshape(n_pad // k, k * in_dim)
    htgt_p = h_tgt.reshape(n_pad // k, k * in_dim)
    harc_p = h_arc.reshape(n_pad // k, k * arc_dim)

    P = block // k                             # packed rows per grid step (mult of 8)

    # VMEM budget with lane padding (double-buffered blocks + resident weights).
    def _lane(c):
        return _round_up(c, 128)
    vmem_bytes = 2 * P * (_lane(k * in_dim) * h_src.dtype.itemsize
                          + _lane(k * in_dim) * h_tgt.dtype.itemsize
                          + _lane(k * arc_dim) * h_arc.dtype.itemsize
                          + _lane(k) * 4)
    vmem_bytes += 2 * 4 * (wsrc_bd.size + wtgt_bd.size + warc_bd.size + rmean.size)
    vmem_limit = int(min(max(vmem_bytes + (4 << 20), 32 << 20), 56 << 20))

    feat = 2 * in_dim + arc_dim
    in_bytes = (hsrc_p.size * hsrc_p.dtype.itemsize
                + htgt_p.size * htgt_p.dtype.itemsize
                + harc_p.size * harc_p.dtype.itemsize)
    w_bytes = 4 * (wsrc_bd.size + wtgt_bd.size + warc_bd.size + rmean.size)
    cost = pl.CostEstimate(flops=2 * n_pad * num_heads * (feat + 1),
                           transcendentals=0,
                           bytes_accessed=in_bytes + w_bytes + n_pad * 4)

    out = pl.pallas_call(
        _gat_kernel,
        out_shape=jax.ShapeDtypeStruct((n_pad // k, k), jnp.float32),
        grid_spec=pltpu.PrefetchScalarGridSpec(
            num_scalar_prefetch=0,
            grid=(steps,),
            in_specs=[
                pl.BlockSpec((P, k * in_dim), lambda i: (i, 0)),
                pl.BlockSpec((P, k * in_dim), lambda i: (i, 0)),
                pl.BlockSpec((P, k * arc_dim), lambda i: (i, 0)),
                # Folded block-diagonal weights + head-mean matrix: constant block
                # index -> DMA'd once, kept resident across the whole grid.
                pl.BlockSpec((k * in_dim, k * num_heads), lambda i: (0, 0)),
                pl.BlockSpec((k * in_dim, k * num_heads), lambda i: (0, 0)),
                pl.BlockSpec((k * arc_dim, k * num_heads), lambda i: (0, 0)),
                pl.BlockSpec((k * num_heads, k), lambda i: (0, 0)),
            ],
            out_specs=pl.BlockSpec((P, k), lambda i: (i, 0)),
        ),
        compiler_params=pltpu.CompilerParams(
            # On v7x the single "parallel" axis lets Mosaic shard grid steps across
            # both TensorCores; if a profile shows one TC idle, switch to an explicit
            # leading core axis (pltpu.CORE_PARALLEL / pl.core_map) and split rows.
            dimension_semantics=("parallel",),
            vmem_limit_bytes=vmem_limit),
        cost_estimate=cost,
    )(hsrc_p, htgt_p, harc_p, wsrc_bd, wtgt_bd, warc_bd, rmean)

    # Packed output [n_pad/k, k]: (row p, lane j) is original row p*k + j.
    return out.reshape(n_pad, 1)[:N]


# ----------------------- parameter init & pure-JAX reference -----------------------

def _xavier_normal(key, out_features, in_features, gain):
    # nn.init.xavier_normal_ on a [out, in] Linear weight
    std = gain * jnp.sqrt(2.0 / (in_features + out_features))
    return jax.random.normal(key, (out_features, in_features), jnp.float32) * std


def init_params(key, in_dim, out_dim, arc_dim, num_heads):
    gain = jnp.sqrt(2.0)  # calculate_gain('relu')
    wsrc, wtgt, warc, attn = [], [], [], []
    for _ in range(num_heads):
        k1, k2, k3, k4, key = jax.random.split(key, 5)
        wsrc.append(_xavier_normal(k1, out_dim, in_dim, gain).T)     # [in, out]
        wtgt.append(_xavier_normal(k2, out_dim, in_dim, gain).T)     # [in, out]
        warc.append(_xavier_normal(k3, out_dim, arc_dim, gain).T)    # [arc, out]
        attn.append(_xavier_normal(k4, 1, 3 * out_dim, gain).T)      # [3*out, 1]
    return (jnp.stack(wsrc), jnp.stack(wtgt), jnp.stack(warc), jnp.stack(attn))


def reference(h_src, h_tgt, h_arc, wsrc, wtgt, warc, attn):
    # Unfused mirror of the PyTorch forward (per-head Linear + concat + attn_fc).
    outs = []
    for h in range(wsrc.shape[0]):
        src = h_src @ wsrc[h]
        tgt = h_tgt @ wtgt[h]
        arc = h_arc.astype(jnp.float32) @ warc[h]
        feat = jnp.concatenate([src, tgt, arc], axis=1)
        a = feat @ attn[h]
        outs.append(jnp.where(a >= 0, a, NEG_SLOPE * a))
    cat = jnp.concatenate(outs, axis=1)            # [N, H]
    return jnp.mean(cat, axis=1)[:, None]          # [N, 1]


if __name__ == "__main__":
    # Small demo shapes; block_n=256 exercises a multi-step, row-padded grid.
    N, in_dim, arc_dim, out_dim, num_heads = 1000, 32, 12, 16, 4

    key = jax.random.PRNGKey(0)
    k_src, k_tgt, k_arc, k_par = jax.random.split(key, 4)
    h_src = jax.random.normal(k_src, (N, in_dim), jnp.float32)
    h_tgt = jax.random.normal(k_tgt, (N, in_dim), jnp.float32)
    h_arc = jax.random.normal(k_arc, (N, arc_dim), jnp.float32)

    wsrc, wtgt, warc, attn = init_params(k_par, in_dim, out_dim, arc_dim, num_heads)

    out = multi_head_gat(h_src, h_tgt, h_arc, wsrc, wtgt, warc, attn, block_n=256)
    out = jax.block_until_ready(out)

    ref = reference(h_src, h_tgt, h_arc, wsrc, wtgt, warc, attn)
    assert out.shape == (N, 1), out.shape
    # Folded (W @ a) association differs from the reference's ((h @ W) @ a) by a few
    # ulps; use a slightly looser tolerance than exact-path comparison.
    assert jnp.allclose(out, ref, atol=1e-4, rtol=1e-4), (out, ref)

    print("KERNEL_OK")
</pallas_src>

<mosaic_0001>
module attributes {stable_mosaic.version = 11 : i64} {
  func.func @_gat_kernel(%arg0: i32, %arg1: memref<8x1024xf32, #tpu.memory_space<vmem>>, %arg2: memref<8x1024xf32, #tpu.memory_space<vmem>>, %arg3: memref<8x384xf32, #tpu.memory_space<vmem>>, %arg4: memref<1024x128xf32, #tpu.memory_space<vmem>>, %arg5: memref<1024x128xf32, #tpu.memory_space<vmem>>, %arg6: memref<384x128xf32, #tpu.memory_space<vmem>>, %arg7: memref<128x32xf32, #tpu.memory_space<vmem>>, %arg8: memref<8x32xf32, #tpu.memory_space<vmem>>) attributes {dimension_semantics = [#tpu.dimension_semantics<parallel>], iteration_bounds = array<i64: 4>, scalar_prefetch = 0 : i64, scratch_operands = 0 : i64, tpu.core_type = #tpu.core_type<tc>, window_params = [{transform_indices = @transform_0, window_bounds = array<i64: 8, 1024>}, {transform_indices = @transform_1, window_bounds = array<i64: 8, 1024>}, {transform_indices = @transform_2, window_bounds = array<i64: 8, 384>}, {pipeline_mode = #tpu.pipeline_mode<synchronous>, transform_indices = @transform_3, window_bounds = array<i64: 1024, 128>}, {pipeline_mode = #tpu.pipeline_mode<synchronous>, transform_indices = @transform_4, window_bounds = array<i64: 1024, 128>}, {pipeline_mode = #tpu.pipeline_mode<synchronous>, transform_indices = @transform_5, window_bounds = array<i64: 384, 128>}, {pipeline_mode = #tpu.pipeline_mode<synchronous>, transform_indices = @transform_6, window_bounds = array<i64: 128, 32>}, {transform_indices = @transform_7, window_bounds = array<i64: 8, 32>}]} {
    %c0 = arith.constant 0 : index
    %c0_0 = arith.constant 0 : index
    %0 = vector.load %arg1[%c0, %c0_0] : memref<8x1024xf32, #tpu.memory_space<vmem>>, vector<8x1024xf32>
    %c0_1 = arith.constant 0 : index
    %c0_2 = arith.constant 0 : index
    %1 = vector.load %arg4[%c0_1, %c0_2] : memref<1024x128xf32, #tpu.memory_space<vmem>>, vector<1024x128xf32>
    %cst = arith.constant dense<0.000000e+00> : vector<8x128xf32>
    %2 = tpu.matmul %0, %1, %cst {dimension_numbers = #tpu.dot_dimension_numbers<[1], [0], [0], [1], [0, 0, 1, 1], [], []>} : vector<8x1024xf32>, vector<1024x128xf32>, vector<8x128xf32> -> vector<8x128xf32>
    %c0_3 = arith.constant 0 : index
    %c0_4 = arith.constant 0 : index
    %3 = vector.load %arg2[%c0_3, %c0_4] : memref<8x1024xf32, #tpu.memory_space<vmem>>, vector<8x1024xf32>
    %c0_5 = arith.constant 0 : index
    %c0_6 = arith.constant 0 : index
    %4 = vector.load %arg5[%c0_5, %c0_6] : memref<1024x128xf32, #tpu.memory_space<vmem>>, vector<1024x128xf32>
    %cst_7 = arith.constant dense<0.000000e+00> : vector<8x128xf32>
    %5 = tpu.matmul %3, %4, %cst_7 {dimension_numbers = #tpu.dot_dimension_numbers<[1], [0], [0], [1], [0, 0, 1, 1], [], []>} : vector<8x1024xf32>, vector<1024x128xf32>, vector<8x128xf32> -> vector<8x128xf32>
    %6 = arith.addf %2, %5 : vector<8x128xf32>
    %c0_8 = arith.constant 0 : index
    %c0_9 = arith.constant 0 : index
    %7 = vector.load %arg3[%c0_8, %c0_9] : memref<8x384xf32, #tpu.memory_space<vmem>>, vector<8x384xf32>
    %c0_10 = arith.constant 0 : index
    %c0_11 = arith.constant 0 : index
    %8 = vector.load %arg6[%c0_10, %c0_11] : memref<384x128xf32, #tpu.memory_space<vmem>>, vector<384x128xf32>
    %cst_12 = arith.constant dense<0.000000e+00> : vector<8x128xf32>
    %9 = tpu.matmul %7, %8, %cst_12 {dimension_numbers = #tpu.dot_dimension_numbers<[1], [0], [0], [1], [0, 0, 1, 1], [], []>} : vector<8x384xf32>, vector<384x128xf32>, vector<8x128xf32> -> vector<8x128xf32>
    %10 = arith.addf %6, %9 : vector<8x128xf32>
    %cst_13 = arith.constant 0.000000e+00 : f32
    %11 = vector.broadcast %cst_13 : f32 to vector<8x128xf32>
    %12 = arith.cmpf oge, %10, %11 : vector<8x128xf32>
    %cst_14 = arith.constant 0.00999999977 : f32
    %13 = vector.broadcast %cst_14 : f32 to vector<8x128xf32>
    %14 = arith.mulf %13, %10 : vector<8x128xf32>
    %15 = arith.select %12, %10, %14 : vector<8x128xi1>, vector<8x128xf32>
    %c0_15 = arith.constant 0 : index
    %c0_16 = arith.constant 0 : index
    %16 = vector.load %arg7[%c0_15, %c0_16] : memref<128x32xf32, #tpu.memory_space<vmem>>, vector<128x32xf32>
    %cst_17 = arith.constant dense<0.000000e+00> : vector<8x32xf32>
    %17 = tpu.matmul %15, %16, %cst_17 {dimension_numbers = #tpu.dot_dimension_numbers<[1], [0], [0], [1], [0, 0, 1, 1], [], []>} : vector<8x128xf32>, vector<128x32xf32>, vector<8x32xf32> -> vector<8x32xf32>
    %c0_18 = arith.constant 0 : index
    %c0_19 = arith.constant 0 : index
    %18 = vector.load %arg8[%c0_18, %c0_19] : memref<8x32xf32, #tpu.memory_space<vmem>>, vector<8x32xf32>
    tpu.vector_store %arg8[%c0_18, %c0_19], %17 {strides = array<i32>} : memref<8x32xf32, #tpu.memory_space<vmem>>, vector<8x32xf32>,
    return
  }
  func.func @transform_0(%arg0: i32) -> (i32, i32) {
    %c0_i32 = arith.constant 0 : i32
    %c0_i32_0 = arith.constant 0 : i32
    return %arg0, %c0_i32 : i32, i32
  }
  func.func @transform_1(%arg0: i32) -> (i32, i32) {
    %c0_i32 = arith.constant 0 : i32
    %c0_i32_0 = arith.constant 0 : i32
    return %arg0, %c0_i32 : i32, i32
  }
  func.func @transform_2(%arg0: i32) -> (i32, i32) {
    %c0_i32 = arith.constant 0 : i32
    %c0_i32_0 = arith.constant 0 : i32
    return %arg0, %c0_i32 : i32, i32
  }
  func.func @transform_3(%arg0: i32) -> (i32, i32) {
    %c0_i32 = arith.constant 0 : i32
    %c0_i32_0 = arith.constant 0 : i32
    %c0_i32_1 = arith.constant 0 : i32
    return %c0_i32, %c0_i32_0 : i32, i32
  }
  func.func @transform_4(%arg0: i32) -> (i32, i32) {
    %c0_i32 = arith.constant 0 : i32
    %c0_i32_0 = arith.constant 0 : i32
    %c0_i32_1 = arith.constant 0 : i32
    return %c0_i32, %c0_i32_0 : i32, i32
  }
  func.func @transform_5(%arg0: i32) -> (i32, i32) {
    %c0_i32 = arith.constant 0 : i32
    %c0_i32_0 = arith.constant 0 : i32
    %c0_i32_1 = arith.constant 0 : i32
    return %c0_i32, %c0_i32_0 : i32, i32
  }
  func.func @transform_6(%arg0: i32) -> (i32, i32) {
    %c0_i32 = arith.constant 0 : i32
    %c0_i32_0 = arith.constant 0 : i32
    %c0_i32_1 = arith.constant 0 : i32
    return %c0_i32, %c0_i32_0 : i32, i32
  }
  func.func @transform_7(%arg0: i32) -> (i32, i32) {
    %c0_i32 = arith.constant 0 : i32
    %c0_i32_0 = arith.constant 0 : i32
    return %arg0, %c0_i32 : i32, i32
  }
}

</mosaic_0001>

<llo_original>
// kernel: tpu_custom_call.1
$region0: #{tpu_custom_call.1}
  #allocation0 [shape = 'u32[]', space=smem, size = 0x4, offset = 0x4, fixed_abs, tag = 'smem constant byte address 0x4 - core index']
  #allocation1 [shape = 'u32[144,128]{1,0:T(1,128)}', space=vmem, size = 0x12000, scoped, tag = 'internal scratch']
  %s0 = inlined_call_operand.hbm [shape: f32[32,1024], index: 0, kind: input, shape index: {}]
  %s1 = inlined_call_operand.hbm [shape: f32[32,1024], index: 1, kind: input, shape index: {}]
  %s2 = inlined_call_operand.vmem [shape: f32[32,384], index: 2, kind: input, shape index: {}]
  %s3 = inlined_call_operand.hbm [shape: f32[1024,128], index: 3, kind: input, shape index: {}]
  %s4 = inlined_call_operand.hbm [shape: f32[1024,128], index: 4, kind: input, shape index: {}]
  %s5 = inlined_call_operand.hbm [shape: f32[384,128], index: 5, kind: input, shape index: {}]
  %s6 = inlined_call_operand.vmem [shape: f32[128,32], index: 6, kind: input, shape index: {}]
  %s7 = inlined_call_operand.hbm [shape: f32[32,32], index: 7, kind: output, shape index: {}]
  %s8 = sld [smem:[#allocation0]]
  $region81: #{tpu_custom_call.1} parent=0
    _
  %s10 = ssub.s32 1, %s8
  %s11 = scalar_select 0, %s10, %s8
  $region1: #{tpu_custom_call.1} parent=0
    #allocation2 [shape = 'u8[65536]{0}', space=vmem, size = 0x10000, scoped, tag = 'input window, operand 0']
    #allocation3 [shape = 's32[2]{0}', space=sflag, size = 0x8, scoped, tag = 'scoped memory for tpu_custom_call.1']
    #allocation4 [shape = 's32[2]{0}', space=sflag, size = 0x8, scoped, tag = 'scoped memory for tpu_custom_call.1']
    #allocation5 [shape = 'u8[65536]{0}', space=vmem, size = 0x10000, scoped, tag = 'input window, operand 1']
    #allocation6 [shape = 's32[2]{0}', space=sflag, size = 0x8, scoped, tag = 'scoped memory for tpu_custom_call.1']
    #allocation7 [shape = 'u8[524288]{0}', space=vmem, size = 0x80000, scoped, tag = 'input window, operand 3, single buffered']
    #allocation8 [shape = 'u8[524288]{0}', space=vmem, size = 0x80000, scoped, tag = 'input window, operand 4, single buffered']
    #allocation9 [shape = 's32[1]{0}', space=sflag, size = 0x4, scoped, tag = 'scoped memory for tpu_custom_call.1']
    #allocation10 [shape = 'u8[196608]{0}', space=vmem, size = 0x30000, scoped, tag = 'input window, operand 5, single buffered']
    #allocation11 [shape = 'u8[8192]{0}', space=vmem, size = 0x2000, scoped, tag = 'output window, operand 0']
    %12 = vsyncpa [#allocation3], 0
    %s13 = scalar_lea.sflag [#allocation3], 1
    %14 = vsyncpa %s13, 0
    %15 = vsyncpa [#allocation6], 0
    %s16 = scalar_lea.sflag [#allocation6], 1
    %17 = vsyncpa %s16, 0
    %18 = vsyncpa [#allocation9], 0
    %19 = vsyncpa [#allocation4], 0
    %s20 = scalar_lea.sflag [#allocation4], 1
    %21 = vsyncpa %s20, 0
    loop: start=0, step=1, limit=6
    $region2: #{tpu_custom_call.1} parent=1 // loop_pre_header
      _
    $region3: #{tpu_custom_call.1} parent=1 // loop_header
      %s23 = sphi 0, %s27
      %p24 = scmp.ge.s32.totalorder %s23, 6
      %s33 = sphi 0, %s35
      %s36 = sphi 0, %s33
      %s37 = sphi 0, %s36
      %s53 = sphi 0, %s37
      %s59 = sphi 0, %s61
      %s62 = sphi 0, %s59
      %s63 = sphi 0, %s62
      %s79 = sphi 0, %s63
      %s85 = sphi 0, %s87
      %s88 = sphi 0, %s85
      %s89 = sphi 0, %s88
      %s105 = sphi 0, %s89
      %s109 = sphi 0, %s109
      %s111 = sphi 0, %s109
      %s112 = sphi 0, %s111
      %s126 = sphi 0, %s112
      %s130 = sphi 0, %s130
      %s132 = sphi 0, %s130
      %s133 = sphi 0, %s132
      %s147 = sphi 0, %s133
      %s151 = sphi 0, %s151
      %s153 = sphi 0, %s151
      %s154 = sphi 0, %s153
      %s168 = sphi 0, %s154
      %s172 = sphi 0, %s172
      %s174 = sphi 0, %s172
      %s175 = sphi 0, %s174
      %s189 = sphi 0, %s175
      %s195 = sphi 0, %s197
      %s198 = sphi 0, %s195
      %s199 = sphi 0, %s198
      %s215 = sphi 0, %s199
    $region4: #{tpu_custom_call.1} parent=1 // loop_header_branch
      %26 = sbr.rel (%p24) target = $region8
    $region5: #{tpu_custom_call.1} parent=1 // loop_body
      %s28 = ssub.s32 %s23, 1
      %s29 = ssub.s32 %s23, 2
      %s30 = sadd.s32 %s23, 1
      %s31 = ssub.s32 %s23, %s30
      %p32 = scmp.eq.s32.totalorder %s31, 0
      %s34 = sadd.s32 %s33, 1
      %s35 = scalar_select %p32, %s33, %s34
      %p38 = pneg %p32
      %p39 = scmp.eq.s32.totalorder %s23, 3
      %p40 = por %p38, %p39
      %p41 = scmp.ne.s32.totalorder %s33, %s36
      %p42 = scmp.eq.s32.totalorder %s23, 0
      %p43 = por %p41, %p42
      %p44 = scmp.ne.s32.totalorder %s33, %s36
      %p45 = scmp.eq.s32.totalorder %s28, 3
      %p46 = por %p44, %p45
      %p47 = scmp.ne.s32.totalorder %s36, %s37
      %p48 = scmp.eq.s32.totalorder %s28, 0
      %p49 = por %p47, %p48
      %p50 = scmp.ne.s32.totalorder %s36, %s37
      %p51 = scmp.eq.s32.totalorder %s29, 3
      %p52 = por %p50, %p51
      %p54 = scmp.ne.s32.totalorder %s37, %s53
      %p55 = scmp.eq.s32.totalorder %s29, 0
      %p56 = por %p54, %p55
      %s57 = ssub.s32 %s23, %s30
      %p58 = scmp.eq.s32.totalorder %s57, 0
      %s60 = sadd.s32 %s59, 1
      %s61 = scalar_select %p58, %s59, %s60
      %p64 = pneg %p58
      %p65 = scmp.eq.s32.totalorder %s23, 3
      %p66 = por %p64, %p65
      %p67 = scmp.ne.s32.totalorder %s59, %s62
      %p68 = scmp.eq.s32.totalorder %s23, 0
      %p69 = por %p67, %p68
      %p70 = scmp.ne.s32.totalorder %s59, %s62
      %p71 = scmp.eq.s32.totalorder %s28, 3
      %p72 = por %p70, %p71
      %p73 = scmp.ne.s32.totalorder %s62, %s63
      %p74 = scmp.eq.s32.totalorder %s28, 0
      %p75 = por %p73, %p74
      %p76 = scmp.ne.s32.totalorder %s62, %s63
      %p77 = scmp.eq.s32.totalorder %s29, 3
      %p78 = por %p76, %p77
      %p80 = scmp.ne.s32.totalorder %s63, %s79
      %p81 = scmp.eq.s32.totalorder %s29, 0
      %p82 = por %p80, %p81
      %s83 = ssub.s32 %s23, %s30
      %p84 = scmp.eq.s32.totalorder %s83, 0
      %s86 = sadd.s32 %s85, 1
      %s87 = scalar_select %p84, %s85, %s86
      %p90 = pneg %p84
      %p91 = scmp.eq.s32.totalorder %s23, 3
      %p92 = por %p90, %p91
      %p93 = scmp.ne.s32.totalorder %s85, %s88
      %p94 = scmp.eq.s32.totalorder %s23, 0
      %p95 = por %p93, %p94
      %p96 = scmp.ne.s32.totalorder %s85, %s88
      %p97 = scmp.eq.s32.totalorder %s28, 3
      %p98 = por %p96, %p97
      %p99 = scmp.ne.s32.totalorder %s88, %s89
      %p100 = scmp.eq.s32.totalorder %s28, 0
      %p101 = por %p99, %p100
      %p102 = scmp.ne.s32.totalorder %s88, %s89
      %p103 = scmp.eq.s32.totalorder %s29, 3
      %p104 = por %p102, %p103
      %p106 = scmp.ne.s32.totalorder %s89, %s105
      %p107 = scmp.eq.s32.totalorder %s29, 0
      %p108 = por %p106, %p107
      %s110 = sadd.s32 %s109, 1
      %p113 = scmp.eq.s32.totalorder %s23, 3
      %p114 = scmp.ne.s32.totalorder %s109, %s111
      %p115 = scmp.eq.s32.totalorder %s23, 0
      %p116 = por %p114, %p115
      %p117 = scmp.ne.s32.totalorder %s109, %s111
      %p118 = scmp.eq.s32.totalorder %s28, 3
      %p119 = por %p117, %p118
      %p120 = scmp.ne.s32.totalorder %s111, %s112
      %p121 = scmp.eq.s32.totalorder %s28, 0
      %p122 = por %p120, %p121
      %p123 = scmp.ne.s32.totalorder %s111, %s112
      %p124 = scmp.eq.s32.totalorder %s29, 3
      %p125 = por %p123, %p124
      %p127 = scmp.ne.s32.totalorder %s112, %s126
      %p128 = scmp.eq.s32.totalorder %s29, 0
      %p129 = por %p127, %p128
      %s131 = sadd.s32 %s130, 1
      %p134 = scmp.eq.s32.totalorder %s23, 3
      %p135 = scmp.ne.s32.totalorder %s130, %s132
      %p136 = scmp.eq.s32.totalorder %s23, 0
      %p137 = por %p135, %p136
      %p138 = scmp.ne.s32.totalorder %s130, %s132
      %p139 = scmp.eq.s32.totalorder %s28, 3
      %p140 = por %p138, %p139
      %p141 = scmp.ne.s32.totalorder %s132, %s133
      %p142 = scmp.eq.s32.totalorder %s28, 0
      %p143 = por %p141, %p142
      %p144 = scmp.ne.s32.totalorder %s132, %s133
      %p145 = scmp.eq.s32.totalorder %s29, 3
      %p146 = por %p144, %p145
      %p148 = scmp.ne.s32.totalorder %s133, %s147
      %p149 = scmp.eq.s32.totalorder %s29, 0
      %p150 = por %p148, %p149
      %s152 = sadd.s32 %s151, 1
      %p155 = scmp.eq.s32.totalorder %s23, 3
      %p156 = scmp.ne.s32.totalorder %s151, %s153
      %p157 = scmp.eq.s32.totalorder %s23, 0
      %p158 = por %p156, %p157
      %p159 = scmp.ne.s32.totalorder %s151, %s153
      %p160 = scmp.eq.s32.totalorder %s28, 3
      %p161 = por %p159, %p160
      %p162 = scmp.ne.s32.totalorder %s153, %s154
      %p163 = scmp.eq.s32.totalorder %s28, 0
      %p164 = por %p162, %p163
      %p165 = scmp.ne.s32.totalorder %s153, %s154
      %p166 = scmp.eq.s32.totalorder %s29, 3
      %p167 = por %p165, %p166
      %p169 = scmp.ne.s32.totalorder %s154, %s168
      %p170 = scmp.eq.s32.totalorder %s29, 0
      %p171 = por %p169, %p170
      %s173 = sadd.s32 %s172, 1
      %p176 = scmp.eq.s32.totalorder %s23, 3
      %p177 = scmp.ne.s32.totalorder %s172, %s174
      %p178 = scmp.eq.s32.totalorder %s23, 0
      %p179 = por %p177, %p178
      %p180 = scmp.ne.s32.totalorder %s172, %s174
      %p181 = scmp.eq.s32.totalorder %s28, 3
      %p182 = por %p180, %p181
      %p183 = scmp.ne.s32.totalorder %s174, %s175
      %p184 = scmp.eq.s32.totalorder %s28, 0
      %p185 = por %p183, %p184
      %p186 = scmp.ne.s32.totalorder %s174, %s175
      %p187 = scmp.eq.s32.totalorder %s29, 3
      %p188 = por %p186, %p187
      %p190 = scmp.ne.s32.totalorder %s175, %s189
      %p191 = scmp.eq.s32.totalorder %s29, 0
      %p192 = por %p190, %p191
      %s193 = ssub.s32 %s23, %s30
      %p194 = scmp.eq.s32.totalorder %s193, 0
      %s196 = sadd.s32 %s195, 1
      %s197 = scalar_select %p194, %s195, %s196
      %p200 = pneg %p194
      %p201 = scmp.eq.s32.totalorder %s23, 3
      %p202 = por %p200, %p201
      %p203 = scmp.ne.s32.totalorder %s195, %s198
      %p204 = scmp.eq.s32.totalorder %s23, 0
      %p205 = por %p203, %p204
      %p206 = scmp.ne.s32.totalorder %s195, %s198
      %p207 = scmp.eq.s32.totalorder %s28, 3
      %p208 = por %p206, %p207
      %p209 = scmp.ne.s32.totalorder %s198, %s199
      %p210 = scmp.eq.s32.totalorder %s28, 0
      %p211 = por %p209, %p210
      %p212 = scmp.ne.s32.totalorder %s198, %s199
      %p213 = scmp.eq.s32.totalorder %s29, 3
      %p214 = por %p212, %p213
      %p216 = scmp.ne.s32.totalorder %s199, %s215
      %p217 = scmp.eq.s32.totalorder %s29, 0
      %p218 = por %p216, %p217
      %p219 = scmp.le.s32.totalorder 1, %s23
      %p220 = scmp.lt.s32.totalorder %s23, 5
      %p221 = pnand %p219, %p220
      %p222 = pneg %p221
      // Predicated region
      $region9: #{tpu_custom_call.1} parent=5 // pred_check
        _
      $region10: #{tpu_custom_call.1} parent=5 // pred_check_branch
        %224 = sbr.rel (%p221) target = $region12
      $region11: #{tpu_custom_call.1} parent=5 // pred_region
        %s225 = ssub.s32 %s23, 1
        // Predicated region
        $region13: #{tpu_custom_call.1} parent=11 // pred_check
          %p226 = pneg %p122
        $region14: #{tpu_custom_call.1} parent=11 // pred_check_branch
          %228 = sbr.rel (%p226) target = $region16
        $region15: #{tpu_custom_call.1} parent=11 // pred_region
          %s230 = ssub.s32 16384, 16384
          %231 = vsyncadd [#allocation6], %s230
          %s232 = sshll.u32 [#allocation7], 4
          %s233 = int_to_ptr.vmem [resolvable:$true] %s232
          %238 = dma.hbm_to_vmem [thread:$0]  %s3, 16384, %s233, [#allocation6], 128, 128, 8
        $region16: #{tpu_custom_call.1} parent=11 // pred_fallthru
          _
        // Predicated region
        $region17: #{tpu_custom_call.1} parent=11 // pred_check
          %p239 = pneg %p143
        $region18: #{tpu_custom_call.1} parent=11 // pred_check_branch
          %241 = sbr.rel (%p239) target = $region20
        $region19: #{tpu_custom_call.1} parent=11 // pred_region
          %s243 = ssub.s32 16384, 16384
          %244 = vsyncadd [#allocation9], %s243
          %s245 = sshll.u32 [#allocation8], 4
          %s246 = int_to_ptr.vmem [resolvable:$true] %s245
          %251 = dma.hbm_to_vmem [thread:$0]  %s4, 16384, %s246, [#allocation9], 128, 128, 8
        $region20: #{tpu_custom_call.1} parent=11 // pred_fallthru
          _
        // Predicated region
        $region21: #{tpu_custom_call.1} parent=11 // pred_check
          %p252 = pneg %p164
        $region22: #{tpu_custom_call.1} parent=11 // pred_check_branch
          %254 = sbr.rel (%p252) target = $region24
        $region23: #{tpu_custom_call.1} parent=11 // pred_region
          %s256 = ssub.s32 6144, 6144
          %257 = vsyncadd [#allocation9], %s256
          %s258 = sshll.u32 [#allocation10], 4
          %s259 = int_to_ptr.vmem [resolvable:$true] %s258
          %264 = dma.hbm_to_vmem [thread:$0]  %s5, 6144, %s259, [#allocation9], 128, 128, 8
        $region24: #{tpu_custom_call.1} parent=11 // pred_fallthru
          _
        // Predicated region
        $region25: #{tpu_custom_call.1} parent=11 // pred_check
          %p265 = pneg %p185
        $region26: #{tpu_custom_call.1} parent=11 // pred_check_branch
          %267 = sbr.rel (%p265) target = $region28
        $region27: #{tpu_custom_call.1} parent=11 // pred_region
          _
        $region28: #{tpu_custom_call.1} parent=11 // pred_fallthru
          _
      $region12: #{tpu_custom_call.1} parent=5 // pred_fallthru
        _
      %p268 = scmp.lt.s32.totalorder %s23, 4
      // Predicated region
      $region29: #{tpu_custom_call.1} parent=5 // pred_check
        %p269 = pneg %p268
      $region30: #{tpu_custom_call.1} parent=5 // pred_check_branch
        %271 = sbr.rel (%p269) target = $region32
      $region31: #{tpu_custom_call.1} parent=5 // pred_region
        // Predicated region
        $region33: #{tpu_custom_call.1} parent=31 // pred_check
          %p272 = pneg %p43
        $region34: #{tpu_custom_call.1} parent=31 // pred_check_branch
          %274 = sbr.rel (%p272) target = $region36
        $region35: #{tpu_custom_call.1} parent=31 // pred_region
          %s275 = sand.u32 %s33, 1
          %s276 = scalar_lea.sflag [#allocation3], %s275
          %s277 = sand.u32 %s33, 1
          %s278 = smul.addr %s277, 64
          %s279 = scalar_lea.vmem [#allocation2], %s278
          %s281 = ssub.s32 1024, 1024
          %282 = vsyncadd %s276, %s281
          %s283 = smul.addr %s23, 8
          %s284 = smul.addr %s283, 128
          %s285 = scalar_lea.hbm %s0, %s284
          %s287 = sshll.u32 %s279, 4
          %s288 = int_to_ptr.vmem [resolvable:$true] %s287
          %290 = dma.hbm_to_vmem [thread:$0]  %s285, 1024, %s288, %s276
        $region36: #{tpu_custom_call.1} parent=31 // pred_fallthru
          _
        // Predicated region
        $region37: #{tpu_custom_call.1} parent=31 // pred_check
          %p291 = pneg %p69
        $region38: #{tpu_custom_call.1} parent=31 // pred_check_branch
          %293 = sbr.rel (%p291) target = $region40
        $region39: #{tpu_custom_call.1} parent=31 // pred_region
          %s294 = sand.u32 %s23, 1
          %s295 = scalar_lea.sflag [#allocation6], %s294
          %s296 = sand.u32 %s59, 1
          %s297 = smul.addr %s296, 64
          %s298 = scalar_lea.vmem [#allocation5], %s297
          %s300 = ssub.s32 1024, 1024
          %301 = vsyncadd %s295, %s300
          %s302 = smul.addr %s23, 8
          %s303 = smul.addr %s302, 128
          %s304 = scalar_lea.hbm %s1, %s303
          %s306 = sshll.u32 %s298, 4
          %s307 = int_to_ptr.vmem [resolvable:$true] %s306
          %309 = dma.hbm_to_vmem [thread:$0]  %s304, 1024, %s307, %s295
        $region40: #{tpu_custom_call.1} parent=31 // pred_fallthru
          _
        // Predicated region
        $region41: #{tpu_custom_call.1} parent=31 // pred_check
          %p310 = pneg %p95
        $region42: #{tpu_custom_call.1} parent=31 // pred_check_branch
          %312 = sbr.rel (%p310) target = $region44
        $region43: #{tpu_custom_call.1} parent=31 // pred_region
          %p313 = scmp.lt.s32.totalorder %s23, 3
          %s314 = scalar_select %p313, %s23, 3
          %s315 = smul.addr %s314, 3
          %s316 = smul.addr %s315, 8
          %s317 = scalar_lea.vmem %s2, %s316
        $region44: #{tpu_custom_call.1} parent=31 // pred_fallthru
          _
      $region32: #{tpu_custom_call.1} parent=5 // pred_fallthru
        _
      %p318 = scmp.le.s32.totalorder 1, %s23
      %p319 = scmp.lt.s32.totalorder %s23, 5
      %p320 = pnand %p318, %p319
      %p321 = pneg %p320
      // Predicated region
      $region45: #{tpu_custom_call.1} parent=5 // pred_check
        _
      $region46: #{tpu_custom_call.1} parent=5 // pred_check_branch
        %323 = sbr.rel (%p320) target = $region48
      $region47: #{tpu_custom_call.1} parent=5 // pred_region
        %s324 = ssub.s32 %s23, 1
        %s325 = sand.u32 %s36, 1
        %s326 = scalar_lea.sflag [#allocation3], %s325
        %s327 = sand.u32 %s36, 1
        %s328 = smul.addr %s327, 64
        %s329 = scalar_lea.vmem [#allocation2], %s328
        // Predicated region
        $region49: #{tpu_custom_call.1} parent=47 // pred_check
          %p330 = pneg %p49
        $region50: #{tpu_custom_call.1} parent=47 // pred_check_branch
          %332 = sbr.rel (%p330) target = $region52
        $region51: #{tpu_custom_call.1} parent=47 // pred_region
          %333 = dma.done %s326, 1024
        $region52: #{tpu_custom_call.1} parent=47 // pred_fallthru
          _
        %s334 = sand.u32 %s28, 1
        %s335 = scalar_lea.sflag [#allocation6], %s334
        %s336 = sand.u32 %s62, 1
        %s337 = smul.addr %s336, 64
        %s338 = scalar_lea.vmem [#allocation5], %s337
        // Predicated region
        $region53: #{tpu_custom_call.1} parent=47 // pred_check
          %p339 = pneg %p75
        $region54: #{tpu_custom_call.1} parent=47 // pred_check_branch
          %341 = sbr.rel (%p339) target = $region56
        $region55: #{tpu_custom_call.1} parent=47 // pred_region
          %342 = dma.done %s335, 1024
        $region56: #{tpu_custom_call.1} parent=47 // pred_fallthru
          _
        // Predicated region
        $region57: #{tpu_custom_call.1} parent=47 // pred_check
          %p343 = pneg %p122
        $region58: #{tpu_custom_call.1} parent=47 // pred_check_branch
          %345 = sbr.rel (%p343) target = $region60
        $region59: #{tpu_custom_call.1} parent=47 // pred_region
          %346 = dma.done [#allocation6], 16384
        $region60: #{tpu_custom_call.1} parent=47 // pred_fallthru
          _
        // Predicated region
        $region61: #{tpu_custom_call.1} parent=47 // pred_check
          %p347 = pneg %p143
        $region62: #{tpu_custom_call.1} parent=47 // pred_check_branch
          %349 = sbr.rel (%p347) target = $region64
        $region63: #{tpu_custom_call.1} parent=47 // pred_region
          %350 = dma.done [#allocation9], 16384
        $region64: #{tpu_custom_call.1} parent=47 // pred_fallthru
          _
        // Predicated region
        $region65: #{tpu_custom_call.1} parent=47 // pred_check
          %p351 = pneg %p164
        $region66: #{tpu_custom_call.1} parent=47 // pred_check_branch
          %353 = sbr.rel (%p351) target = $region68
        $region67: #{tpu_custom_call.1} parent=47 // pred_region
          %354 = dma.done [#allocation9], 6144
        $region68: #{tpu_custom_call.1} parent=47 // pred_fallthru
          _
        %s355 = sand.u32 %s36, 1
        %s356 = scalar_lea.sflag [#allocation3], %s355
        %s357 = sand.u32 %s36, 1
        %s358 = smul.addr %s357, 64
        %s359 = scalar_lea.vmem [#allocation2], %s358
        %p360 = pneg %p49
        %p361 = pneg %p46
        %s362 = sand.u32 %s28, 1
        %s363 = scalar_lea.sflag [#allocation6], %s362
        %s364 = sand.u32 %s62, 1
        %s365 = smul.addr %s364, 64
        %s366 = scalar_lea.vmem [#allocation5], %s365
        %p367 = pneg %p75
        %p368 = pneg %p72
        %p369 = scmp.lt.s32.totalorder %s28, 3
        %s370 = scalar_select %p369, %s28, 3
        %s371 = smul.addr %s370, 3
        %s372 = smul.addr %s371, 8
        %s373 = scalar_lea.vmem %s2, %s372
        %p374 = pneg %p101
        %p375 = pneg %p98
        %p376 = pneg %p122
        %p377 = pneg %p119
        %p378 = pneg %p143
        %p379 = pneg %p140
        %p380 = pneg %p164
        %p381 = pneg %p161
        %p382 = pneg %p185
        %p383 = pneg %p182
        %p384 = pneg %p211
        %p385 = pneg %p208
        %s386 = sand.u32 %s198, 1
        %s387 = scalar_lea.sflag [#allocation4], %s386
        %s388 = sand.u32 %s198, 1
        %s389 = smul.addr %s388, 8
        %s390 = scalar_lea.vmem [#allocation11], %s389
        %p391 = scmp.lt.s32.totalorder %s28, 3
        %s392 = scalar_select %p391, %s28, 3
        %s393 = smul.addr %s392, 3
        %s394 = smul.addr %s393, 8
        %s395 = scalar_lea.vmem %s2, %s394
        %v396 = vld [vmem:[%s329] sm:$0xff]
        %v397 = vld [vmem:[%s329 + $0x8] sm:$0xff]
        %v398 = vld [vmem:[%s329 + $0x10] sm:$0xff]
        %v399 = vld [vmem:[%s329 + $0x18] sm:$0xff]
        %v400 = vld [vmem:[%s329 + $0x20] sm:$0xff]
        %v401 = vld [vmem:[%s329 + $0x28] sm:$0xff]
        %v402 = vld [vmem:[%s329 + $0x30] sm:$0xff]
        %v403 = vld [vmem:[%s329 + $0x38] sm:$0xff]
        %v404 = vld [vmem:[#allocation7] sm:$0xff]
        %v405 = vld [vmem:[#allocation7 + $0x8] sm:$0xff]
        %v406 = vld [vmem:[#allocation7 + $0x10] sm:$0xff]
        %v407 = vld [vmem:[#allocation7 + $0x18] sm:$0xff]
        %v408 = vld [vmem:[#allocation7 + $0x20] sm:$0xff]
        %v409 = vld [vmem:[#allocation7 + $0x28] sm:$0xff]
        %v410 = vld [vmem:[#allocation7 + $0x30] sm:$0xff]
        %v411 = vld [vmem:[#allocation7 + $0x38] sm:$0xff]
        %v412 = vld [vmem:[#allocation7 + $0x40] sm:$0xff]
        %v413 = vld [vmem:[#allocation7 + $0x48] sm:$0xff]
        %v414 = vld [vmem:[#allocation7 + $0x50] sm:$0xff]
        %v415 = vld [vmem:[#allocation7 + $0x58] sm:$0xff]
        %v416 = vld [vmem:[#allocation7 + $0x60] sm:$0xff]
        %v417 = vld [vmem:[#allocation7 + $0x68] sm:$0xff]
        %v418 = vld [vmem:[#allocation7 + $0x70] sm:$0xff]
        %v419 = vld [vmem:[#allocation7 + $0x78] sm:$0xff]
        %v420 = vld [vmem:[#allocation7 + $0x80] sm:$0xff]
        %v421 = vld [vmem:[#allocation7 + $0x88] sm:$0xff]
        %v422 = vld [vmem:[#allocation7 + $0x90] sm:$0xff]
        %v423 = vld [vmem:[#allocation7 + $0x98] sm:$0xff]
        %v424 = vld [vmem:[#allocation7 + $0xa0] sm:$0xff]
        %v425 = vld [vmem:[#allocation7 + $0xa8] sm:$0xff]
        %v426 = vld [vmem:[#allocation7 + $0xb0] sm:$0xff]
        %v427 = vld [vmem:[#allocation7 + $0xb8] sm:$0xff]
        %v428 = vld [vmem:[#allocation7 + $0xc0] sm:$0xff]
        %v429 = vld [vmem:[#allocation7 + $0xc8] sm:$0xff]
        %v430 = vld [vmem:[#allocation7 + $0xd0] sm:$0xff]
        %v431 = vld [vmem:[#allocation7 + $0xd8] sm:$0xff]
        %v432 = vld [vmem:[#allocation7 + $0xe0] sm:$0xff]
        %v433 = vld [vmem:[#allocation7 + $0xe8] sm:$0xff]
        %v434 = vld [vmem:[#allocation7 + $0xf0] sm:$0xff]
        %v435 = vld [vmem:[#allocation7 + $0xf8] sm:$0xff]
        %v436 = vld [vmem:[#allocation7 + $0x100] sm:$0xff]
        %v437 = vld [vmem:[#allocation7 + $0x108] sm:$0xff]
        %v438 = vld [vmem:[#allocation7 + $0x110] sm:$0xff]
        %v439 = vld [vmem:[#allocation7 + $0x118] sm:$0xff]
        %v440 = vld [vmem:[#allocation7 + $0x120] sm:$0xff]
        %v441 = vld [vmem:[#allocation7 + $0x128] sm:$0xff]
        %v442 = vld [vmem:[#allocation7 + $0x130] sm:$0xff]
        %v443 = vld [vmem:[#allocation7 + $0x138] sm:$0xff]
        %v444 = vld [vmem:[#allocation7 + $0x140] sm:$0xff]
        %v445 = vld [vmem:[#allocation7 + $0x148] sm:$0xff]
        %v446 = vld [vmem:[#allocation7 + $0x150] sm:$0xff]
        %v447 = vld [vmem:[#allocation7 + $0x158] sm:$0xff]
        %v448 = vld [vmem:[#allocation7 + $0x160] sm:$0xff]
        %v449 = vld [vmem:[#allocation7 + $0x168] sm:$0xff]
        %v450 = vld [vmem:[#allocation7 + $0x170] sm:$0xff]
        %v451 = vld [vmem:[#allocation7 + $0x178] sm:$0xff]
        %v452 = vld [vmem:[#allocation7 + $0x180] sm:$0xff]
        %v453 = vld [vmem:[#allocation7 + $0x188] sm:$0xff]
        %v454 = vld [vmem:[#allocation7 + $0x190] sm:$0xff]
        %v455 = vld [vmem:[#allocation7 + $0x198] sm:$0xff]
        %v456 = vld [vmem:[#allocation7 + $0x1a0] sm:$0xff]
        %v457 = vld [vmem:[#allocation7 + $0x1a8] sm:$0xff]
        %v458 = vld [vmem:[#allocation7 + $0x1b0] sm:$0xff]
        %v459 = vld [vmem:[#allocation7 + $0x1b8] sm:$0xff]
        %v460 = vld [vmem:[#allocation7 + $0x1c0] sm:$0xff]
        %v461 = vld [vmem:[#allocation7 + $0x1c8] sm:$0xff]
        %v462 = vld [vmem:[#allocation7 + $0x1d0] sm:$0xff]
        %v463 = vld [vmem:[#allocation7 + $0x1d8] sm:$0xff]
        %v464 = vld [vmem:[#allocation7 + $0x1e0] sm:$0xff]
        %v465 = vld [vmem:[#allocation7 + $0x1e8] sm:$0xff]
        %v466 = vld [vmem:[#allocation7 + $0x1f0] sm:$0xff]
        %v467 = vld [vmem:[#allocation7 + $0x1f8] sm:$0xff]
        %v468 = vld [vmem:[#allocation7 + $0x200] sm:$0xff]
        %v469 = vld [vmem:[#allocation7 + $0x208] sm:$0xff]
        %v470 = vld [vmem:[#allocation7 + $0x210] sm:$0xff]
        %v471 = vld [vmem:[#allocation7 + $0x218] sm:$0xff]
        %v472 = vld [vmem:[#allocation7 + $0x220] sm:$0xff]
        %v473 = vld [vmem:[#allocation7 + $0x228] sm:$0xff]
        %v474 = vld [vmem:[#allocation7 + $0x230] sm:$0xff]
        %v475 = vld [vmem:[#allocation7 + $0x238] sm:$0xff]
        %v476 = vld [vmem:[#allocation7 + $0x240] sm:$0xff]
        %v477 = vld [vmem:[#allocation7 + $0x248] sm:$0xff]
        %v478 = vld [vmem:[#allocation7 + $0x250] sm:$0xff]
        %v479 = vld [vmem:[#allocation7 + $0x258] sm:$0xff]
        %v480 = vld [vmem:[#allocation7 + $0x260] sm:$0xff]
        %v481 = vld [vmem:[#allocation7 + $0x268] sm:$0xff]
        %v482 = vld [vmem:[#allocation7 + $0x270] sm:$0xff]
        %v483 = vld [vmem:[#allocation7 + $0x278] sm:$0xff]
        %v484 = vld [vmem:[#allocation7 + $0x280] sm:$0xff]
        %v485 = vld [vmem:[#allocation7 + $0x288] sm:$0xff]
        %v486 = vld [vmem:[#allocation7 + $0x290] sm:$0xff]
        %v487 = vld [vmem:[#allocation7 + $0x298] sm:$0xff]
        %v488 = vld [vmem:[#allocation7 + $0x2a0] sm:$0xff]
        %v489 = vld [vmem:[#allocation7 + $0x2a8] sm:$0xff]
        %v490 = vld [vmem:[#allocation7 + $0x2b0] sm:$0xff]
        %v491 = vld [vmem:[#allocation7 + $0x2b8] sm:$0xff]
        %v492 = vld [vmem:[#allocation7 + $0x2c0] sm:$0xff]
        %v493 = vld [vmem:[#allocation7 + $0x2c8] sm:$0xff]
        %v494 = vld [vmem:[#allocation7 + $0x2d0] sm:$0xff]
        %v495 = vld [vmem:[#allocation7 + $0x2d8] sm:$0xff]
        %v496 = vld [vmem:[#allocation7 + $0x2e0] sm:$0xff]
        %v497 = vld [vmem:[#allocation7 + $0x2e8] sm:$0xff]
        %v498 = vld [vmem:[#allocation7 + $0x2f0] sm:$0xff]
        %v499 = vld [vmem:[#allocation7 + $0x2f8] sm:$0xff]
        %v500 = vld [vmem:[#allocation7 + $0x300] sm:$0xff]
        %v501 = vld [vmem:[#allocation7 + $0x308] sm:$0xff]
        %v502 = vld [vmem:[#allocation7 + $0x310] sm:$0xff]
        %v503 = vld [vmem:[#allocation7 + $0x318] sm:$0xff]
        %v504 = vld [vmem:[#allocation7 + $0x320] sm:$0xff]
        %v505 = vld [vmem:[#allocation7 + $0x328] sm:$0xff]
        %v506 = vld [vmem:[#allocation7 + $0x330] sm:$0xff]
        %v507 = vld [vmem:[#allocation7 + $0x338] sm:$0xff]
        %v508 = vld [vmem:[#allocation7 + $0x340] sm:$0xff]
        %v509 = vld [vmem:[#allocation7 + $0x348] sm:$0xff]
        %v510 = vld [vmem:[#allocation7 + $0x350] sm:$0xff]
        %v511 = vld [vmem:[#allocation7 + $0x358] sm:$0xff]
        %v512 = vld [vmem:[#allocation7 + $0x360] sm:$0xff]
        %v513 = vld [vmem:[#allocation7 + $0x368] sm:$0xff]
        %v514 = vld [vmem:[#allocation7 + $0x370] sm:$0xff]
        %v515 = vld [vmem:[#allocation7 + $0x378] sm:$0xff]
        %v516 = vld [vmem:[#allocation7 + $0x380] sm:$0xff]
        %v517 = vld [vmem:[#allocation7 + $0x388] sm:$0xff]
        %v518 = vld [vmem:[#allocation7 + $0x390] sm:$0xff]
        %v519 = vld [vmem:[#allocation7 + $0x398] sm:$0xff]
        %v520 = vld [vmem:[#allocation7 + $0x3a0] sm:$0xff]
        %v521 = vld [vmem:[#allocation7 + $0x3a8] sm:$0xff]
        %v522 = vld [vmem:[#allocation7 + $0x3b0] sm:$0xff]
        %v523 = vld [vmem:[#allocation7 + $0x3b8] sm:$0xff]
        %v524 = vld [vmem:[#allocation7 + $0x3c0] sm:$0xff]
        %v525 = vld [vmem:[#allocation7 + $0x3c8] sm:$0xff]
        %v526 = vld [vmem:[#allocation7 + $0x3d0] sm:$0xff]
        %v527 = vld [vmem:[#allocation7 + $0x3d8] sm:$0xff]
        %v528 = vld [vmem:[#allocation7 + $0x3e0] sm:$0xff]
        %v529 = vld [vmem:[#allocation7 + $0x3e8] sm:$0xff]
        %v530 = vld [vmem:[#allocation7 + $0x3f0] sm:$0xff]
        %v531 = vld [vmem:[#allocation7 + $0x3f8] sm:$0xff]
        %v532 = vld [vmem:[%s338] sm:$0xff]
        %v533 = vld [vmem:[%s338 + $0x8] sm:$0xff]
        %v534 = vld [vmem:[%s338 + $0x10] sm:$0xff]
        %v535 = vld [vmem:[%s338 + $0x18] sm:$0xff]
        %v536 = vld [vmem:[%s338 + $0x20] sm:$0xff]
        %v537 = vld [vmem:[%s338 + $0x28] sm:$0xff]
        %v538 = vld [vmem:[%s338 + $0x30] sm:$0xff]
        %v539 = vld [vmem:[%s338 + $0x38] sm:$0xff]
        %v540 = vld [vmem:[#allocation8] sm:$0xff]
        %v541 = vld [vmem:[#allocation8 + $0x8] sm:$0xff]
        %v542 = vld [vmem:[#allocation8 + $0x10] sm:$0xff]
        %v543 = vld [vmem:[#allocation8 + $0x18] sm:$0xff]
        %v544 = vld [vmem:[#allocation8 + $0x20] sm:$0xff]
        %v545 = vld [vmem:[#allocation8 + $0x28] sm:$0xff]
        %v546 = vld [vmem:[#allocation8 + $0x30] sm:$0xff]
        %v547 = vld [vmem:[#allocation8 + $0x38] sm:$0xff]
        %v548 = vld [vmem:[#allocation8 + $0x40] sm:$0xff]
        %v549 = vld [vmem:[#allocation8 + $0x48] sm:$0xff]
        %v550 = vld [vmem:[#allocation8 + $0x50] sm:$0xff]
        %v551 = vld [vmem:[#allocation8 + $0x58] sm:$0xff]
        %v552 = vld [vmem:[#allocation8 + $0x60] sm:$0xff]
        %v553 = vld [vmem:[#allocation8 + $0x68] sm:$0xff]
        %v554 = vld [vmem:[#allocation8 + $0x70] sm:$0xff]
        %v555 = vld [vmem:[#allocation8 + $0x78] sm:$0xff]
        %v556 = vld [vmem:[#allocation8 + $0x80] sm:$0xff]
        %v557 = vld [vmem:[#allocation8 + $0x88] sm:$0xff]
        %v558 = vld [vmem:[#allocation8 + $0x90] sm:$0xff]
        %v559 = vld [vmem:[#allocation8 + $0x98] sm:$0xff]
        %v560 = vld [vmem:[#allocation8 + $0xa0] sm:$0xff]
        %v561 = vld [vmem:[#allocation8 + $0xa8] sm:$0xff]
        %v562 = vld [vmem:[#allocation8 + $0xb0] sm:$0xff]
        %v563 = vld [vmem:[#allocation8 + $0xb8] sm:$0xff]
        %v564 = vld [vmem:[#allocation8 + $0xc0] sm:$0xff]
        %v565 = vld [vmem:[#allocation8 + $0xc8] sm:$0xff]
        %v566 = vld [vmem:[#allocation8 + $0xd0] sm:$0xff]
        %v567 = vld [vmem:[#allocation8 + $0xd8] sm:$0xff]
        %v568 = vld [vmem:[#allocation8 + $0xe0] sm:$0xff]
        %v569 = vld [vmem:[#allocation8 + $0xe8] sm:$0xff]
        %v570 = vld [vmem:[#allocation8 + $0xf0] sm:$0xff]
        %v571 = vld [vmem:[#allocation8 + $0xf8] sm:$0xff]
        %v572 = vld [vmem:[#allocation8 + $0x100] sm:$0xff]
        %v573 = vld [vmem:[#allocation8 + $0x108] sm:$0xff]
        %v574 = vld [vmem:[#allocation8 + $0x110] sm:$0xff]
        %v575 = vld [vmem:[#allocation8 + $0x118] sm:$0xff]
        %v576 = vld [vmem:[#allocation8 + $0x120] sm:$0xff]
        %v577 = vld [vmem:[#allocation8 + $0x128] sm:$0xff]
        %v578 = vld [vmem:[#allocation8 + $0x130] sm:$0xff]
        %v579 = vld [vmem:[#allocation8 + $0x138] sm:$0xff]
        %v580 = vld [vmem:[#allocation8 + $0x140] sm:$0xff]
        %v581 = vld [vmem:[#allocation8 + $0x148] sm:$0xff]
        %v582 = vld [vmem:[#allocation8 + $0x150] sm:$0xff]
        %v583 = vld [vmem:[#allocation8 + $0x158] sm:$0xff]
        %v584 = vld [vmem:[#allocation8 + $0x160] sm:$0xff]
        %v585 = vld [vmem:[#allocation8 + $0x168] sm:$0xff]
        %v586 = vld [vmem:[#allocation8 + $0x170] sm:$0xff]
        %v587 = vld [vmem:[#allocation8 + $0x178] sm:$0xff]
        %v588 = vld [vmem:[#allocation8 + $0x180] sm:$0xff]
        %v589 = vld [vmem:[#allocation8 + $0x188] sm:$0xff]
        %v590 = vld [vmem:[#allocation8 + $0x190] sm:$0xff]
        %v591 = vld [vmem:[#allocation8 + $0x198] sm:$0xff]
        %v592 = vld [vmem:[#allocation8 + $0x1a0] sm:$0xff]
        %v593 = vld [vmem:[#allocation8 + $0x1a8] sm:$0xff]
        %v594 = vld [vmem:[#allocation8 + $0x1b0] sm:$0xff]
        %v595 = vld [vmem:[#allocation8 + $0x1b8] sm:$0xff]
        %v596 = vld [vmem:[#allocation8 + $0x1c0] sm:$0xff]
        %v597 = vld [vmem:[#allocation8 + $0x1c8] sm:$0xff]
        %v598 = vld [vmem:[#allocation8 + $0x1d0] sm:$0xff]
        %v599 = vld [vmem:[#allocation8 + $0x1d8] sm:$0xff]
        %v600 = vld [vmem:[#allocation8 + $0x1e0] sm:$0xff]
        %v601 = vld [vmem:[#allocation8 + $0x1e8] sm:$0xff]
        %v602 = vld [vmem:[#allocation8 + $0x1f0] sm:$0xff]
        %v603 = vld [vmem:[#allocation8 + $0x1f8] sm:$0xff]
        %v604 = vld [vmem:[#allocation8 + $0x200] sm:$0xff]
        %v605 = vld [vmem:[#allocation8 + $0x208] sm:$0xff]
        %v606 = vld [vmem:[#allocation8 + $0x210] sm:$0xff]
        %v607 = vld [vmem:[#allocation8 + $0x218] sm:$0xff]
        %v608 = vld [vmem:[#allocation8 + $0x220] sm:$0xff]
        %v609 = vld [vmem:[#allocation8 + $0x228] sm:$0xff]
        %v610 = vld [vmem:[#allocation8 + $0x230] sm:$0xff]
        %v611 = vld [vmem:[#allocation8 + $0x238] sm:$0xff]
        %v612 = vld [vmem:[#allocation8 + $0x240] sm:$0xff]
        %v613 = vld [vmem:[#allocation8 + $0x248] sm:$0xff]
        %v614 = vld [vmem:[#allocation8 + $0x250] sm:$0xff]
        %v615 = vld [vmem:[#allocation8 + $0x258] sm:$0xff]
        %v616 = vld [vmem:[#allocation8 + $0x260] sm:$0xff]
        %v617 = vld [vmem:[#allocation8 + $0x268] sm:$0xff]
        %v618 = vld [vmem:[#allocation8 + $0x270] sm:$0xff]
        %v619 = vld [vmem:[#allocation8 + $0x278] sm:$0xff]
        %v620 = vld [vmem:[#allocation8 + $0x280] sm:$0xff]
        %v621 = vld [vmem:[#allocation8 + $0x288] sm:$0xff]
        %v622 = vld [vmem:[#allocation8 + $0x290] sm:$0xff]
        %v623 = vld [vmem:[#allocation8 + $0x298] sm:$0xff]
        %v624 = vld [vmem:[#allocation8 + $0x2a0] sm:$0xff]
        %v625 = vld [vmem:[#allocation8 + $0x2a8] sm:$0xff]
        %v626 = vld [vmem:[#allocation8 + $0x2b0] sm:$0xff]
        %v627 = vld [vmem:[#allocation8 + $0x2b8] sm:$0xff]
        %v628 = vld [vmem:[#allocation8 + $0x2c0] sm:$0xff]
        %v629 = vld [vmem:[#allocation8 + $0x2c8] sm:$0xff]
        %v630 = vld [vmem:[#allocation8 + $0x2d0] sm:$0xff]
        %v631 = vld [vmem:[#allocation8 + $0x2d8] sm:$0xff]
        %v632 = vld [vmem:[#allocation8 + $0x2e0] sm:$0xff]
        %v633 = vld [vmem:[#allocation8 + $0x2e8] sm:$0xff]
        %v634 = vld [vmem:[#allocation8 + $0x2f0] sm:$0xff]
        %v635 = vld [vmem:[#allocation8 + $0x2f8] sm:$0xff]
        %v636 = vld [vmem:[#allocation8 + $0x300] sm:$0xff]
        %v637 = vld [vmem:[#allocation8 + $0x308] sm:$0xff]
        %v638 = vld [vmem:[#allocation8 + $0x310] sm:$0xff]
        %v639 = vld [vmem:[#allocation8 + $0x318] sm:$0xff]
        %v640 = vld [vmem:[#allocation8 + $0x320] sm:$0xff]
        %v641 = vld [vmem:[#allocation8 + $0x328] sm:$0xff]
        %v642 = vld [vmem:[#allocation8 + $0x330] sm:$0xff]
        %v643 = vld [vmem:[#allocation8 + $0x338] sm:$0xff]
        %v644 = vld [vmem:[#allocation8 + $0x340] sm:$0xff]
        %v645 = vld [vmem:[#allocation8 + $0x348] sm:$0xff]
        %v646 = vld [vmem:[#allocation8 + $0x350] sm:$0xff]
        %v647 = vld [vmem:[#allocation8 + $0x358] sm:$0xff]
        %v648 = vld [vmem:[#allocation8 + $0x360] sm:$0xff]
        %v649 = vld [vmem:[#allocation8 + $0x368] sm:$0xff]
        %v650 = vld [vmem:[#allocation8 + $0x370] sm:$0xff]
        %v651 = vld [vmem:[#allocation8 + $0x378] sm:$0xff]
        %v652 = vld [vmem:[#allocation8 + $0x380] sm:$0xff]
        %v653 = vld [vmem:[#allocation8 + $0x388] sm:$0xff]
        %v654 = vld [vmem:[#allocation8 + $0x390] sm:$0xff]
        %v655 = vld [vmem:[#allocation8 + $0x398] sm:$0xff]
        %v656 = vld [vmem:[#allocation8 + $0x3a0] sm:$0xff]
        %v657 = vld [vmem:[#allocation8 + $0x3a8] sm:$0xff]
        %v658 = vld [vmem:[#allocation8 + $0x3b0] sm:$0xff]
        %v659 = vld [vmem:[#allocation8 + $0x3b8] sm:$0xff]
        %v660 = vld [vmem:[#allocation8 + $0x3c0] sm:$0xff]
        %v661 = vld [vmem:[#allocation8 + $0x3c8] sm:$0xff]
        %v662 = vld [vmem:[#allocation8 + $0x3d0] sm:$0xff]
        %v663 = vld [vmem:[#allocation8 + $0x3d8] sm:$0xff]
        %v664 = vld [vmem:[#allocation8 + $0x3e0] sm:$0xff]
        %v665 = vld [vmem:[#allocation8 + $0x3e8] sm:$0xff]
        %v666 = vld [vmem:[#allocation8 + $0x3f0] sm:$0xff]
        %v667 = vld [vmem:[#allocation8 + $0x3f8] sm:$0xff]
        %668 = vmatprep.subr.mxu0 0.0
        %669 = vmatpush1.msra.mxu0 %v555
        %670 = vmatprep.subr.mxu0 0.0
        %671 = vmatpush1.msra.mxu0 %v554
        %672 = vmatprep.subr.mxu0 0.0
        %673 = vmatpush1.msra.mxu0 %v553
        %674 = vmatprep.subr.mxu0 0.0
        %675 = vmatpush1.msra.mxu0 %v552
        %676 = vmatprep.subr.mxu0 0.0
        %677 = vmatpush1.msra.mxu0 %v551
        %678 = vmatprep.subr.mxu0 0.0
        %679 = vmatpush1.msra.mxu0 %v550
        %680 = vmatprep.subr.mxu0 0.0
        %681 = vmatpush1.msra.mxu0 %v549
        %682 = vmatprep.subr.mxu0 0.0
        %683 = vmatpush1.msra.mxu0 %v548
        %684 = vmatprep.subr.mxu0 0.0
        %685 = vmatpush1.msra.mxu0 %v547
        %686 = vmatprep.subr.mxu0 0.0
        %687 = vmatpush1.msra.mxu0 %v546
        %688 = vmatprep.subr.mxu0 0.0
        %689 = vmatpush1.msra.mxu0 %v545
        %690 = vmatprep.subr.mxu0 0.0
        %691 = vmatpush1.msra.mxu0 %v544
        %692 = vmatprep.subr.mxu0 0.0
        %693 = vmatpush1.msra.mxu0 %v543
        %694 = vmatprep.subr.mxu0 0.0
        %695 = vmatpush1.msra.mxu0 %v542
        %696 = vmatprep.subr.mxu0 0.0
        %697 = vmatpush1.msra.mxu0 %v541
        %698 = vmatprep.subr.mxu0 0.0
        %699 = vmatpush1.msra.mxu0 %v540
        %700 = vmatprep.subr.mxu0 0.0
        %701 = vmatpush2.msra.mxu0 %v571
        %702 = vmatprep.subr.mxu0 0.0
        %703 = vmatpush2.msra.mxu0 %v570
        %704 = vmatprep.subr.mxu0 0.0
        %705 = vmatpush2.msra.mxu0 %v569
        %706 = vmatprep.subr.mxu0 0.0
        %707 = vmatpush2.msra.mxu0 %v568
        %708 = vmatprep.subr.mxu0 0.0
        %709 = vmatpush2.msra.mxu0 %v567
        %710 = vmatprep.subr.mxu0 0.0
        %711 = vmatpush2.msra.mxu0 %v566
        %712 = vmatprep.subr.mxu0 0.0
        %713 = vmatpush2.msra.mxu0 %v565
        %714 = vmatprep.subr.mxu0 0.0
        %715 = vmatpush2.msra.mxu0 %v564
        %716 = vmatprep.subr.mxu0 0.0
        %717 = vmatpush2.msra.mxu0 %v563
        %718 = vmatprep.subr.mxu0 0.0
        %719 = vmatpush2.msra.mxu0 %v562
        %720 = vmatprep.subr.mxu0 0.0
        %721 = vmatpush2.msra.mxu0 %v561
        %722 = vmatprep.subr.mxu0 0.0
        %723 = vmatpush2.msra.mxu0 %v560
        %724 = vmatprep.subr.mxu0 0.0
        %725 = vmatpush2.msra.mxu0 %v559
        %726 = vmatprep.subr.mxu0 0.0
        %727 = vmatpush2.msra.mxu0 %v558
        %728 = vmatprep.subr.mxu0 0.0
        %729 = vmatpush2.msra.mxu0 %v557
        %730 = vmatprep.subr.mxu0 0.0
        %731 = vmatpush2.msra.mxu0 %v556
        %732 = vmatprep.mubr.f32.mxu0 %v533
        %733 = vmatmul.mubr.f32.gmra.mxu0 %v532
        %v734 = vpop.f32.mrf.mxu0
        %v735 = vadd.f32 0.0, %v734
        %v736 = vpop.f32.mrf.mxu0
        %737 = vdwg.mxu0
        %738 = vmatprep.subr.mxu0 0.0
        %739 = vmatpush1.msra.mxu0 %v587
        %740 = vmatprep.subr.mxu0 0.0
        %741 = vmatpush1.msra.mxu0 %v586
        %742 = vmatprep.subr.mxu0 0.0
        %743 = vmatpush1.msra.mxu0 %v585
        %744 = vmatprep.subr.mxu0 0.0
        %745 = vmatpush1.msra.mxu0 %v584
        %746 = vmatprep.subr.mxu0 0.0
        %747 = vmatpush1.msra.mxu0 %v583
        %748 = vmatprep.subr.mxu0 0.0
        %749 = vmatpush1.msra.mxu0 %v582
        %750 = vmatprep.subr.mxu0 0.0
        %751 = vmatpush1.msra.mxu0 %v581
        %752 = vmatprep.subr.mxu0 0.0
        %753 = vmatpush1.msra.mxu0 %v580
        %754 = vmatprep.subr.mxu0 0.0
        %755 = vmatpush1.msra.mxu0 %v579
        %756 = vmatprep.subr.mxu0 0.0
        %757 = vmatpush1.msra.mxu0 %v578
        %758 = vmatprep.subr.mxu0 0.0
        %759 = vmatpush1.msra.mxu0 %v577
        %760 = vmatprep.subr.mxu0 0.0
        %761 = vmatpush1.msra.mxu0 %v576
        %762 = vmatprep.subr.mxu0 0.0
        %763 = vmatpush1.msra.mxu0 %v575
        %764 = vmatprep.subr.mxu0 0.0
        %765 = vmatpush1.msra.mxu0 %v574
        %766 = vmatprep.subr.mxu0 0.0
        %767 = vmatpush1.msra.mxu0 %v573
        %768 = vmatprep.subr.mxu0 0.0
        %769 = vmatpush1.msra.mxu0 %v572
        %770 = vmatprep.subr.mxu0 0.0
        %771 = vmatpush2.msra.mxu0 %v603
        %772 = vmatprep.subr.mxu0 0.0
        %773 = vmatpush2.msra.mxu0 %v602
        %774 = vmatprep.subr.mxu0 0.0
        %775 = vmatpush2.msra.mxu0 %v601
        %776 = vmatprep.subr.mxu0 0.0
        %777 = vmatpush2.msra.mxu0 %v600
        %778 = vmatprep.subr.mxu0 0.0
        %779 = vmatpush2.msra.mxu0 %v599
        %780 = vmatprep.subr.mxu0 0.0
        %781 = vmatpush2.msra.mxu0 %v598
        %782 = vmatprep.subr.mxu0 0.0
        %783 = vmatpush2.msra.mxu0 %v597
        %784 = vmatprep.subr.mxu0 0.0
        %785 = vmatpush2.msra.mxu0 %v596
        %786 = vmatprep.subr.mxu0 0.0
        %787 = vmatpush2.msra.mxu0 %v595
        %788 = vmatprep.subr.mxu0 0.0
        %789 = vmatpush2.msra.mxu0 %v594
        %790 = vmatprep.subr.mxu0 0.0
        %791 = vmatpush2.msra.mxu0 %v593
        %792 = vmatprep.subr.mxu0 0.0
        %793 = vmatpush2.msra.mxu0 %v592
        %794 = vmatprep.subr.mxu0 0.0
        %795 = vmatpush2.msra.mxu0 %v591
        %796 = vmatprep.subr.mxu0 0.0
        %797 = vmatpush2.msra.mxu0 %v590
        %798 = vmatprep.subr.mxu0 0.0
        %799 = vmatpush2.msra.mxu0 %v589
        %800 = vmatprep.subr.mxu0 0.0
        %801 = vmatpush2.msra.mxu0 %v588
        %802 = vmatprep.mubr.f32.mxu0 %v535
        %803 = vmatmul.mubr.f32.gmra.mxu0 %v534
        %v804 = vpop.f32.mrf.mxu0
        %v805 = vadd.f32 %v735, %v804
        %v806 = vpop.f32.mrf.mxu0
        %807 = vdwg.mxu0
        %808 = vmatprep.subr.mxu0 0.0
        %809 = vmatpush1.msra.mxu0 %v619
        %810 = vmatprep.subr.mxu0 0.0
        %811 = vmatpush1.msra.mxu0 %v618
        %812 = vmatprep.subr.mxu0 0.0
        %813 = vmatpush1.msra.mxu0 %v617
        %814 = vmatprep.subr.mxu0 0.0
        %815 = vmatpush1.msra.mxu0 %v616
        %816 = vmatprep.subr.mxu0 0.0
        %817 = vmatpush1.msra.mxu0 %v615
        %818 = vmatprep.subr.mxu0 0.0
        %819 = vmatpush1.msra.mxu0 %v614
        %820 = vmatprep.subr.mxu0 0.0
        %821 = vmatpush1.msra.mxu0 %v613
        %822 = vmatprep.subr.mxu0 0.0
        %823 = vmatpush1.msra.mxu0 %v612
        %824 = vmatprep.subr.mxu0 0.0
        %825 = vmatpush1.msra.mxu0 %v611
        %826 = vmatprep.subr.mxu0 0.0
        %827 = vmatpush1.msra.mxu0 %v610
        %828 = vmatprep.subr.mxu0 0.0
        %829 = vmatpush1.msra.mxu0 %v609
        %830 = vmatprep.subr.mxu0 0.0
        %831 = vmatpush1.msra.mxu0 %v608
        %832 = vmatprep.subr.mxu0 0.0
        %833 = vmatpush1.msra.mxu0 %v607
        %834 = vmatprep.subr.mxu0 0.0
        %835 = vmatpush1.msra.mxu0 %v606
        %836 = vmatprep.subr.mxu0 0.0
        %837 = vmatpush1.msra.mxu0 %v605
        %838 = vmatprep.subr.mxu0 0.0
        %839 = vmatpush1.msra.mxu0 %v604
        %840 = vmatprep.subr.mxu0 0.0
        %841 = vmatpush2.msra.mxu0 %v635
        %842 = vmatprep.subr.mxu0 0.0
        %843 = vmatpush2.msra.mxu0 %v634
        %844 = vmatprep.subr.mxu0 0.0
        %845 = vmatpush2.msra.mxu0 %v633
        %846 = vmatprep.subr.mxu0 0.0
        %847 = vmatpush2.msra.mxu0 %v632
        %848 = vmatprep.subr.mxu0 0.0
        %849 = vmatpush2.msra.mxu0 %v631
        %850 = vmatprep.subr.mxu0 0.0
        %851 = vmatpush2.msra.mxu0 %v630
        %852 = vmatprep.subr.mxu0 0.0
        %853 = vmatpush2.msra.mxu0 %v629
        %854 = vmatprep.subr.mxu0 0.0
        %855 = vmatpush2.msra.mxu0 %v628
        %856 = vmatprep.subr.mxu0 0.0
        %857 = vmatpush2.msra.mxu0 %v627
        %858 = vmatprep.subr.mxu0 0.0
        %859 = vmatpush2.msra.mxu0 %v626
        %860 = vmatprep.subr.mxu0 0.0
        %861 = vmatpush2.msra.mxu0 %v625
        %862 = vmatprep.subr.mxu0 0.0
        %863 = vmatpush2.msra.mxu0 %v624
        %864 = vmatprep.subr.mxu0 0.0
        %865 = vmatpush2.msra.mxu0 %v623
        %866 = vmatprep.subr.mxu0 0.0
        %867 = vmatpush2.msra.mxu0 %v622
        %868 = vmatprep.subr.mxu0 0.0
        %869 = vmatpush2.msra.mxu0 %v621
        %870 = vmatprep.subr.mxu0 0.0
        %871 = vmatpush2.msra.mxu0 %v620
        %872 = vmatprep.mubr.f32.mxu0 %v537
        %873 = vmatmul.mubr.f32.gmra.mxu0 %v536
        %v874 = vpop.f32.mrf.mxu0
        %v875 = vadd.f32 %v805, %v874
        %v876 = vpop.f32.mrf.mxu0
        %877 = vdwg.mxu0
        %878 = vmatprep.subr.mxu0 0.0
        %879 = vmatpush1.msra.mxu0 %v651
        %880 = vmatprep.subr.mxu0 0.0
        %881 = vmatpush1.msra.mxu0 %v650
        %882 = vmatprep.subr.mxu0 0.0
        %883 = vmatpush1.msra.mxu0 %v649
        %884 = vmatprep.subr.mxu0 0.0
        %885 = vmatpush1.msra.mxu0 %v648
        %886 = vmatprep.subr.mxu0 0.0
        %887 = vmatpush1.msra.mxu0 %v647
        %888 = vmatprep.subr.mxu0 0.0
        %889 = vmatpush1.msra.mxu0 %v646
        %890 = vmatprep.subr.mxu0 0.0
        %891 = vmatpush1.msra.mxu0 %v645
        %892 = vmatprep.subr.mxu0 0.0
        %893 = vmatpush1.msra.mxu0 %v644
        %894 = vmatprep.subr.mxu0 0.0
        %895 = vmatpush1.msra.mxu0 %v643
        %896 = vmatprep.subr.mxu0 0.0
        %897 = vmatpush1.msra.mxu0 %v642
        %898 = vmatprep.subr.mxu0 0.0
        %899 = vmatpush1.msra.mxu0 %v641
        %900 = vmatprep.subr.mxu0 0.0
        %901 = vmatpush1.msra.mxu0 %v640
        %902 = vmatprep.subr.mxu0 0.0
        %903 = vmatpush1.msra.mxu0 %v639
        %904 = vmatprep.subr.mxu0 0.0
        %905 = vmatpush1.msra.mxu0 %v638
        %906 = vmatprep.subr.mxu0 0.0
        %907 = vmatpush1.msra.mxu0 %v637
        %908 = vmatprep.subr.mxu0 0.0
        %909 = vmatpush1.msra.mxu0 %v636
        %910 = vmatprep.subr.mxu0 0.0
        %911 = vmatpush2.msra.mxu0 %v667
        %912 = vmatprep.subr.mxu0 0.0
        %913 = vmatpush2.msra.mxu0 %v666
        %914 = vmatprep.subr.mxu0 0.0
        %915 = vmatpush2.msra.mxu0 %v665
        %916 = vmatprep.subr.mxu0 0.0
        %917 = vmatpush2.msra.mxu0 %v664
        %918 = vmatprep.subr.mxu0 0.0
        %919 = vmatpush2.msra.mxu0 %v663
        %920 = vmatprep.subr.mxu0 0.0
        %921 = vmatpush2.msra.mxu0 %v662
        %922 = vmatprep.subr.mxu0 0.0
        %923 = vmatpush2.msra.mxu0 %v661
        %924 = vmatprep.subr.mxu0 0.0
        %925 = vmatpush2.msra.mxu0 %v660
        %926 = vmatprep.subr.mxu0 0.0
        %927 = vmatpush2.msra.mxu0 %v659
        %928 = vmatprep.subr.mxu0 0.0
        %929 = vmatpush2.msra.mxu0 %v658
        %930 = vmatprep.subr.mxu0 0.0
        %931 = vmatpush2.msra.mxu0 %v657
        %932 = vmatprep.subr.mxu0 0.0
        %933 = vmatpush2.msra.mxu0 %v656
        %934 = vmatprep.subr.mxu0 0.0
        %935 = vmatpush2.msra.mxu0 %v655
        %936 = vmatprep.subr.mxu0 0.0
        %937 = vmatpush2.msra.mxu0 %v654
        %938 = vmatprep.subr.mxu0 0.0
        %939 = vmatpush2.msra.mxu0 %v653
        %940 = vmatprep.subr.mxu0 0.0
        %941 = vmatpush2.msra.mxu0 %v652
        %942 = vmatprep.mubr.f32.mxu0 %v539
        %943 = vmatmul.mubr.f32.gmra.mxu0 %v538
        %v944 = vpop.f32.mrf.mxu0
        %v945 = vadd.f32 %v875, %v944
        %v946 = vpop.f32.mrf.mxu0
        %947 = vdwg.mxu0
        %948 = vmatprep.subr.mxu0 0.0
        %949 = vmatpush1.msra.mxu0 %v419
        %950 = vmatprep.subr.mxu0 0.0
        %951 = vmatpush1.msra.mxu0 %v418
        %952 = vmatprep.subr.mxu0 0.0
        %953 = vmatpush1.msra.mxu0 %v417
        %954 = vmatprep.subr.mxu0 0.0
        %955 = vmatpush1.msra.mxu0 %v416
        %956 = vmatprep.subr.mxu0 0.0
        %957 = vmatpush1.msra.mxu0 %v415
        %958 = vmatprep.subr.mxu0 0.0
        %959 = vmatpush1.msra.mxu0 %v414
        %960 = vmatprep.subr.mxu0 0.0
        %961 = vmatpush1.msra.mxu0 %v413
        %962 = vmatprep.subr.mxu0 0.0
        %963 = vmatpush1.msra.mxu0 %v412
        %964 = vmatprep.subr.mxu0 0.0
        %965 = vmatpush1.msra.mxu0 %v411
        %966 = vmatprep.subr.mxu0 0.0
        %967 = vmatpush1.msra.mxu0 %v410
        %968 = vmatprep.subr.mxu0 0.0
        %969 = vmatpush1.msra.mxu0 %v409
        %970 = vmatprep.subr.mxu0 0.0
        %971 = vmatpush1.msra.mxu0 %v408
        %972 = vmatprep.subr.mxu0 0.0
        %973 = vmatpush1.msra.mxu0 %v407
        %974 = vmatprep.subr.mxu0 0.0
        %975 = vmatpush1.msra.mxu0 %v406
        %976 = vmatprep.subr.mxu0 0.0
        %977 = vmatpush1.msra.mxu0 %v405
        %978 = vmatprep.subr.mxu0 0.0
        %979 = vmatpush1.msra.mxu0 %v404
        %980 = vmatprep.subr.mxu0 0.0
        %981 = vmatpush2.msra.mxu0 %v435
        %982 = vmatprep.subr.mxu0 0.0
        %983 = vmatpush2.msra.mxu0 %v434
        %984 = vmatprep.subr.mxu0 0.0
        %985 = vmatpush2.msra.mxu0 %v433
        %986 = vmatprep.subr.mxu0 0.0
        %987 = vmatpush2.msra.mxu0 %v432
        %988 = vmatprep.subr.mxu0 0.0
        %989 = vmatpush2.msra.mxu0 %v431
        %990 = vmatprep.subr.mxu0 0.0
        %991 = vmatpush2.msra.mxu0 %v430
        %992 = vmatprep.subr.mxu0 0.0
        %993 = vmatpush2.msra.mxu0 %v429
        %994 = vmatprep.subr.mxu0 0.0
        %995 = vmatpush2.msra.mxu0 %v428
        %996 = vmatprep.subr.mxu0 0.0
        %997 = vmatpush2.msra.mxu0 %v427
        %998 = vmatprep.subr.mxu0 0.0
        %999 = vmatpush2.msra.mxu0 %v426
        %1000 = vmatprep.subr.mxu0 0.0
        %1001 = vmatpush2.msra.mxu0 %v425
        %1002 = vmatprep.subr.mxu0 0.0
        %1003 = vmatpush2.msra.mxu0 %v424
        %1004 = vmatprep.subr.mxu0 0.0
        %1005 = vmatpush2.msra.mxu0 %v423
        %1006 = vmatprep.subr.mxu0 0.0
        %1007 = vmatpush2.msra.mxu0 %v422
        %1008 = vmatprep.subr.mxu0 0.0
        %1009 = vmatpush2.msra.mxu0 %v421
        %1010 = vmatprep.subr.mxu0 0.0
        %1011 = vmatpush2.msra.mxu0 %v420
        %1012 = vmatprep.mubr.f32.mxu0 %v397
        %1013 = vmatmul.mubr.f32.gmra.mxu0 %v396
        %v1014 = vpop.f32.mrf.mxu0
        %v1015 = vadd.f32 %v945, %v1014
        %v1016 = vpop.f32.mrf.mxu0
        %1017 = vdwg.mxu0
        %1018 = vmatprep.subr.mxu0 0.0
        %1019 = vmatpush1.msra.mxu0 %v451
        %1020 = vmatprep.subr.mxu0 0.0
        %1021 = vmatpush1.msra.mxu0 %v450
        %1022 = vmatprep.subr.mxu0 0.0
        %1023 = vmatpush1.msra.mxu0 %v449
        %1024 = vmatprep.subr.mxu0 0.0
        %1025 = vmatpush1.msra.mxu0 %v448
        %1026 = vmatprep.subr.mxu0 0.0
        %1027 = vmatpush1.msra.mxu0 %v447
        %1028 = vmatprep.subr.mxu0 0.0
        %1029 = vmatpush1.msra.mxu0 %v446
        %1030 = vmatprep.subr.mxu0 0.0
        %1031 = vmatpush1.msra.mxu0 %v445
        %1032 = vmatprep.subr.mxu0 0.0
        %1033 = vmatpush1.msra.mxu0 %v444
        %1034 = vmatprep.subr.mxu0 0.0
        %1035 = vmatpush1.msra.mxu0 %v443
        %1036 = vmatprep.subr.mxu0 0.0
        %1037 = vmatpush1.msra.mxu0 %v442
        %1038 = vmatprep.subr.mxu0 0.0
        %1039 = vmatpush1.msra.mxu0 %v441
        %1040 = vmatprep.subr.mxu0 0.0
        %1041 = vmatpush1.msra.mxu0 %v440
        %1042 = vmatprep.subr.mxu0 0.0
        %1043 = vmatpush1.msra.mxu0 %v439
        %1044 = vmatprep.subr.mxu0 0.0
        %1045 = vmatpush1.msra.mxu0 %v438
        %1046 = vmatprep.subr.mxu0 0.0
        %1047 = vmatpush1.msra.mxu0 %v437
        %1048 = vmatprep.subr.mxu0 0.0
        %1049 = vmatpush1.msra.mxu0 %v436
        %1050 = vmatprep.subr.mxu0 0.0
        %1051 = vmatpush2.msra.mxu0 %v467
        %1052 = vmatprep.subr.mxu0 0.0
        %1053 = vmatpush2.msra.mxu0 %v466
        %1054 = vmatprep.subr.mxu0 0.0
        %1055 = vmatpush2.msra.mxu0 %v465
        %1056 = vmatprep.subr.mxu0 0.0
        %1057 = vmatpush2.msra.mxu0 %v464
        %1058 = vmatprep.subr.mxu0 0.0
        %1059 = vmatpush2.msra.mxu0 %v463
        %1060 = vmatprep.subr.mxu0 0.0
        %1061 = vmatpush2.msra.mxu0 %v462
        %1062 = vmatprep.subr.mxu0 0.0
        %1063 = vmatpush2.msra.mxu0 %v461
        %1064 = vmatprep.subr.mxu0 0.0
        %1065 = vmatpush2.msra.mxu0 %v460
        %1066 = vmatprep.subr.mxu0 0.0
        %1067 = vmatpush2.msra.mxu0 %v459
        %1068 = vmatprep.subr.mxu0 0.0
        %1069 = vmatpush2.msra.mxu0 %v458
        %1070 = vmatprep.subr.mxu0 0.0
        %1071 = vmatpush2.msra.mxu0 %v457
        %1072 = vmatprep.subr.mxu0 0.0
        %1073 = vmatpush2.msra.mxu0 %v456
        %1074 = vmatprep.subr.mxu0 0.0
        %1075 = vmatpush2.msra.mxu0 %v455
        %1076 = vmatprep.subr.mxu0 0.0
        %1077 = vmatpush2.msra.mxu0 %v454
        %1078 = vmatprep.subr.mxu0 0.0
        %1079 = vmatpush2.msra.mxu0 %v453
        %1080 = vmatprep.subr.mxu0 0.0
        %1081 = vmatpush2.msra.mxu0 %v452
        %1082 = vmatprep.mubr.f32.mxu0 %v399
        %1083 = vmatmul.mubr.f32.gmra.mxu0 %v398
        %v1084 = vpop.f32.mrf.mxu0
        %v1085 = vadd.f32 %v1015, %v1084
        %v1086 = vpop.f32.mrf.mxu0
        %1087 = vdwg.mxu0
        %1088 = vmatprep.subr.mxu0 0.0
        %1089 = vmatpush1.msra.mxu0 %v483
        %1090 = vmatprep.subr.mxu0 0.0
        %1091 = vmatpush1.msra.mxu0 %v482
        %1092 = vmatprep.subr.mxu0 0.0
        %1093 = vmatpush1.msra.mxu0 %v481
        %1094 = vmatprep.subr.mxu0 0.0
        %1095 = vmatpush1.msra.mxu0 %v480
        %1096 = vmatprep.subr.mxu0 0.0
        %1097 = vmatpush1.msra.mxu0 %v479
        %1098 = vmatprep.subr.mxu0 0.0
        %1099 = vmatpush1.msra.mxu0 %v478
        %1100 = vmatprep.subr.mxu0 0.0
        %1101 = vmatpush1.msra.mxu0 %v477
        %1102 = vmatprep.subr.mxu0 0.0
        %1103 = vmatpush1.msra.mxu0 %v476
        %1104 = vmatprep.subr.mxu0 0.0
        %1105 = vmatpush1.msra.mxu0 %v475
        %1106 = vmatprep.subr.mxu0 0.0
        %1107 = vmatpush1.msra.mxu0 %v474
        %1108 = vmatprep.subr.mxu0 0.0
        %1109 = vmatpush1.msra.mxu0 %v473
        %1110 = vmatprep.subr.mxu0 0.0
        %1111 = vmatpush1.msra.mxu0 %v472
        %1112 = vmatprep.subr.mxu0 0.0
        %1113 = vmatpush1.msra.mxu0 %v471
        %1114 = vmatprep.subr.mxu0 0.0
        %1115 = vmatpush1.msra.mxu0 %v470
        %1116 = vmatprep.subr.mxu0 0.0
        %1117 = vmatpush1.msra.mxu0 %v469
        %1118 = vmatprep.subr.mxu0 0.0
        %1119 = vmatpush1.msra.mxu0 %v468
        %1120 = vmatprep.subr.mxu0 0.0
        %1121 = vmatpush2.msra.mxu0 %v499
        %1122 = vmatprep.subr.mxu0 0.0
        %1123 = vmatpush2.msra.mxu0 %v498
        %1124 = vmatprep.subr.mxu0 0.0
        %1125 = vmatpush2.msra.mxu0 %v497
        %1126 = vmatprep.subr.mxu0 0.0
        %1127 = vmatpush2.msra.mxu0 %v496
        %1128 = vmatprep.subr.mxu0 0.0
        %1129 = vmatpush2.msra.mxu0 %v495
        %1130 = vmatprep.subr.mxu0 0.0
        %1131 = vmatpush2.msra.mxu0 %v494
        %1132 = vmatprep.subr.mxu0 0.0
        %1133 = vmatpush2.msra.mxu0 %v493
        %1134 = vmatprep.subr.mxu0 0.0
        %1135 = vmatpush2.msra.mxu0 %v492
        %1136 = vmatprep.subr.mxu0 0.0
        %1137 = vmatpush2.msra.mxu0 %v491
        %1138 = vmatprep.subr.mxu0 0.0
        %1139 = vmatpush2.msra.mxu0 %v490
        %1140 = vmatprep.subr.mxu0 0.0
        %1141 = vmatpush2.msra.mxu0 %v489
        %1142 = vmatprep.subr.mxu0 0.0
        %1143 = vmatpush2.msra.mxu0 %v488
        %1144 = vmatprep.subr.mxu0 0.0
        %1145 = vmatpush2.msra.mxu0 %v487
        %1146 = vmatprep.subr.mxu0 0.0
        %1147 = vmatpush2.msra.mxu0 %v486
        %1148 = vmatprep.subr.mxu0 0.0
        %1149 = vmatpush2.msra.mxu0 %v485
        %1150 = vmatprep.subr.mxu0 0.0
        %1151 = vmatpush2.msra.mxu0 %v484
        %1152 = vmatprep.mubr.f32.mxu0 %v401
        %1153 = vmatmul.mubr.f32.gmra.mxu0 %v400
        %v1154 = vpop.f32.mrf.mxu0
        %v1155 = vadd.f32 %v1085, %v1154
        %v1156 = vpop.f32.mrf.mxu0
        %1157 = vdwg.mxu0
        %1158 = vmatprep.subr.mxu0 0.0
        %1159 = vmatpush1.msra.mxu0 %v515
        %1160 = vmatprep.subr.mxu0 0.0
        %1161 = vmatpush1.msra.mxu0 %v514
        %1162 = vmatprep.subr.mxu0 0.0
        %1163 = vmatpush1.msra.mxu0 %v513
        %1164 = vmatprep.subr.mxu0 0.0
        %1165 = vmatpush1.msra.mxu0 %v512
        %1166 = vmatprep.subr.mxu0 0.0
        %1167 = vmatpush1.msra.mxu0 %v511
        %1168 = vmatprep.subr.mxu0 0.0
        %1169 = vmatpush1.msra.mxu0 %v510
        %1170 = vmatprep.subr.mxu0 0.0
        %1171 = vmatpush1.msra.mxu0 %v509
        %1172 = vmatprep.subr.mxu0 0.0
        %1173 = vmatpush1.msra.mxu0 %v508
        %1174 = vmatprep.subr.mxu0 0.0
        %1175 = vmatpush1.msra.mxu0 %v507
        %1176 = vmatprep.subr.mxu0 0.0
        %1177 = vmatpush1.msra.mxu0 %v506
        %1178 = vmatprep.subr.mxu0 0.0
        %1179 = vmatpush1.msra.mxu0 %v505
        %1180 = vmatprep.subr.mxu0 0.0
        %1181 = vmatpush1.msra.mxu0 %v504
        %1182 = vmatprep.subr.mxu0 0.0
        %1183 = vmatpush1.msra.mxu0 %v503
        %1184 = vmatprep.subr.mxu0 0.0
        %1185 = vmatpush1.msra.mxu0 %v502
        %1186 = vmatprep.subr.mxu0 0.0
        %1187 = vmatpush1.msra.mxu0 %v501
        %1188 = vmatprep.subr.mxu0 0.0
        %1189 = vmatpush1.msra.mxu0 %v500
        %1190 = vmatprep.subr.mxu0 0.0
        %1191 = vmatpush2.msra.mxu0 %v531
        %1192 = vmatprep.subr.mxu0 0.0
        %1193 = vmatpush2.msra.mxu0 %v530
        %1194 = vmatprep.subr.mxu0 0.0
        %1195 = vmatpush2.msra.mxu0 %v529
        %1196 = vmatprep.subr.mxu0 0.0
        %1197 = vmatpush2.msra.mxu0 %v528
        %1198 = vmatprep.subr.mxu0 0.0
        %1199 = vmatpush2.msra.mxu0 %v527
        %1200 = vmatprep.subr.mxu0 0.0
        %1201 = vmatpush2.msra.mxu0 %v526
        %1202 = vmatprep.subr.mxu0 0.0
        %1203 = vmatpush2.msra.mxu0 %v525
        %1204 = vmatprep.subr.mxu0 0.0
        %1205 = vmatpush2.msra.mxu0 %v524
        %1206 = vmatprep.subr.mxu0 0.0
        %1207 = vmatpush2.msra.mxu0 %v523
        %1208 = vmatprep.subr.mxu0 0.0
        %1209 = vmatpush2.msra.mxu0 %v522
        %1210 = vmatprep.subr.mxu0 0.0
        %1211 = vmatpush2.msra.mxu0 %v521
        %1212 = vmatprep.subr.mxu0 0.0
        %1213 = vmatpush2.msra.mxu0 %v520
        %1214 = vmatprep.subr.mxu0 0.0
        %1215 = vmatpush2.msra.mxu0 %v519
        %1216 = vmatprep.subr.mxu0 0.0
        %1217 = vmatpush2.msra.mxu0 %v518
        %1218 = vmatprep.subr.mxu0 0.0
        %1219 = vmatpush2.msra.mxu0 %v517
        %1220 = vmatprep.subr.mxu0 0.0
        %1221 = vmatpush2.msra.mxu0 %v516
        %1222 = vmatprep.mubr.f32.mxu0 %v403
        %1223 = vmatmul.mubr.f32.gmra.mxu0 %v402
        %v1224 = vpop.f32.mrf.mxu0
        %v1225 = vadd.f32 %v1155, %v1224
        %v1226 = vpop.f32.mrf.mxu0
        %1227 = vdwg.mxu0
        %v1228 = vld [vmem:[%s395] sm:$0xff]
        %v1229 = vld [vmem:[%s395 + $0x8] sm:$0xff]
        %v1230 = vld [vmem:[%s395 + $0x10] sm:$0xff]
        %v1231 = vld [vmem:[#allocation10] sm:$0xff]
        %v1232 = vld [vmem:[#allocation10 + $0x8] sm:$0xff]
        %v1233 = vld [vmem:[#allocation10 + $0x10] sm:$0xff]
        %v1234 = vld [vmem:[#allocation10 + $0x18] sm:$0xff]
        %v1235 = vld [vmem:[#allocation10 + $0x20] sm:$0xff]
        %v1236 = vld [vmem:[#allocation10 + $0x28] sm:$0xff]
        %v1237 = vld [vmem:[#allocation10 + $0x30] sm:$0xff]
        %v1238 = vld [vmem:[#allocation10 + $0x38] sm:$0xff]
        %v1239 = vld [vmem:[#allocation10 + $0x40] sm:$0xff]
        %v1240 = vld [vmem:[#allocation10 + $0x48] sm:$0xff]
        %v1241 = vld [vmem:[#allocation10 + $0x50] sm:$0xff]
        %v1242 = vld [vmem:[#allocation10 + $0x58] sm:$0xff]
        %v1243 = vld [vmem:[#allocation10 + $0x60] sm:$0xff]
        %v1244 = vld [vmem:[#allocation10 + $0x68] sm:$0xff]
        %v1245 = vld [vmem:[#allocation10 + $0x70] sm:$0xff]
        %v1246 = vld [vmem:[#allocation10 + $0x78] sm:$0xff]
        %v1247 = vld [vmem:[#allocation10 + $0x80] sm:$0xff]
        %v1248 = vld [vmem:[#allocation10 + $0x88] sm:$0xff]
        %v1249 = vld [vmem:[#allocation10 + $0x90] sm:$0xff]
        %v1250 = vld [vmem:[#allocation10 + $0x98] sm:$0xff]
        %v1251 = vld [vmem:[#allocation10 + $0xa0] sm:$0xff]
        %v1252 = vld [vmem:[#allocation10 + $0xa8] sm:$0xff]
        %v1253 = vld [vmem:[#allocation10 + $0xb0] sm:$0xff]
        %v1254 = vld [vmem:[#allocation10 + $0xb8] sm:$0xff]
        %v1255 = vld [vmem:[#allocation10 + $0xc0] sm:$0xff]
        %v1256 = vld [vmem:[#allocation10 + $0xc8] sm:$0xff]
        %v1257 = vld [vmem:[#allocation10 + $0xd0] sm:$0xff]
        %v1258 = vld [vmem:[#allocation10 + $0xd8] sm:$0xff]
        %v1259 = vld [vmem:[#allocation10 + $0xe0] sm:$0xff]
        %v1260 = vld [vmem:[#allocation10 + $0xe8] sm:$0xff]
        %v1261 = vld [vmem:[#allocation10 + $0xf0] sm:$0xff]
        %v1262 = vld [vmem:[#allocation10 + $0xf8] sm:$0xff]
        %v1263 = vld [vmem:[#allocation10 + $0x100] sm:$0xff]
        %v1264 = vld [vmem:[#allocation10 + $0x108] sm:$0xff]
        %v1265 = vld [vmem:[#allocation10 + $0x110] sm:$0xff]
        %v1266 = vld [vmem:[#allocation10 + $0x118] sm:$0xff]
        %v1267 = vld [vmem:[#allocation10 + $0x120] sm:$0xff]
        %v1268 = vld [vmem:[#allocation10 + $0x128] sm:$0xff]
        %v1269 = vld [vmem:[#allocation10 + $0x130] sm:$0xff]
        %v1270 = vld [vmem:[#allocation10 + $0x138] sm:$0xff]
        %v1271 = vld [vmem:[#allocation10 + $0x140] sm:$0xff]
        %v1272 = vld [vmem:[#allocation10 + $0x148] sm:$0xff]
        %v1273 = vld [vmem:[#allocation10 + $0x150] sm:$0xff]
        %v1274 = vld [vmem:[#allocation10 + $0x158] sm:$0xff]
        %v1275 = vld [vmem:[#allocation10 + $0x160] sm:$0xff]
        %v1276 = vld [vmem:[#allocation10 + $0x168] sm:$0xff]
        %v1277 = vld [vmem:[#allocation10 + $0x170] sm:$0xff]
        %v1278 = vld [vmem:[#allocation10 + $0x178] sm:$0xff]
        %1279 = vmatprep.subr.mxu0 0.0
        %1280 = vmatpush1.msra.mxu0 %v1246
        %1281 = vmatprep.subr.mxu0 0.0
        %1282 = vmatpush1.msra.mxu0 %v1245
        %1283 = vmatprep.subr.mxu0 0.0
        %1284 = vmatpush1.msra.mxu0 %v1244
        %1285 = vmatprep.subr.mxu0 0.0
        %1286 = vmatpush1.msra.mxu0 %v1243
        %1287 = vmatprep.subr.mxu0 0.0
        %1288 = vmatpush1.msra.mxu0 %v1242
        %1289 = vmatprep.subr.mxu0 0.0
        %1290 = vmatpush1.msra.mxu0 %v1241
        %1291 = vmatprep.subr.mxu0 0.0
        %1292 = vmatpush1.msra.mxu0 %v1240
        %1293 = vmatprep.subr.mxu0 0.0
        %1294 = vmatpush1.msra.mxu0 %v1239
        %1295 = vmatprep.subr.mxu0 0.0
        %1296 = vmatpush1.msra.mxu0 %v1238
        %1297 = vmatprep.subr.mxu0 0.0
        %1298 = vmatpush1.msra.mxu0 %v1237
        %1299 = vmatprep.subr.mxu0 0.0
        %1300 = vmatpush1.msra.mxu0 %v1236
        %1301 = vmatprep.subr.mxu0 0.0
        %1302 = vmatpush1.msra.mxu0 %v1235
        %1303 = vmatprep.subr.mxu0 0.0
        %1304 = vmatpush1.msra.mxu0 %v1234
        %1305 = vmatprep.subr.mxu0 0.0
        %1306 = vmatpush1.msra.mxu0 %v1233
        %1307 = vmatprep.subr.mxu0 0.0
        %1308 = vmatpush1.msra.mxu0 %v1232
        %1309 = vmatprep.subr.mxu0 0.0
        %1310 = vmatpush1.msra.mxu0 %v1231
        %1311 = vmatprep.subr.mxu0 0.0
        %1312 = vmatpush2.msra.mxu0 %v1262
        %1313 = vmatprep.subr.mxu0 0.0
        %1314 = vmatpush2.msra.mxu0 %v1261
        %1315 = vmatprep.subr.mxu0 0.0
        %1316 = vmatpush2.msra.mxu0 %v1260
        %1317 = vmatprep.subr.mxu0 0.0
        %1318 = vmatpush2.msra.mxu0 %v1259
        %1319 = vmatprep.subr.mxu0 0.0
        %1320 = vmatpush2.msra.mxu0 %v1258
        %1321 = vmatprep.subr.mxu0 0.0
        %1322 = vmatpush2.msra.mxu0 %v1257
        %1323 = vmatprep.subr.mxu0 0.0
        %1324 = vmatpush2.msra.mxu0 %v1256
        %1325 = vmatprep.subr.mxu0 0.0
        %1326 = vmatpush2.msra.mxu0 %v1255
        %1327 = vmatprep.subr.mxu0 0.0
        %1328 = vmatpush2.msra.mxu0 %v1254
        %1329 = vmatprep.subr.mxu0 0.0
        %1330 = vmatpush2.msra.mxu0 %v1253
        %1331 = vmatprep.subr.mxu0 0.0
        %1332 = vmatpush2.msra.mxu0 %v1252
        %1333 = vmatprep.subr.mxu0 0.0
        %1334 = vmatpush2.msra.mxu0 %v1251
        %1335 = vmatprep.subr.mxu0 0.0
        %1336 = vmatpush2.msra.mxu0 %v1250
        %1337 = vmatprep.subr.mxu0 0.0
        %1338 = vmatpush2.msra.mxu0 %v1249
        %1339 = vmatprep.subr.mxu0 0.0
        %1340 = vmatpush2.msra.mxu0 %v1248
        %1341 = vmatprep.subr.mxu0 0.0
        %1342 = vmatpush2.msra.mxu0 %v1247
        %1343 = vmatprep.mubr.f32.mxu0 %v1229
        %1344 = vmatmul.mubr.f32.gmra.mxu0 %v1228
        %v1345 = vpop.f32.mrf.mxu0
        %v1346 = vadd.f32 0.0, %v1345
        %v1347 = vpop.f32.mrf.mxu0
        %1348 = vdwg.mxu0
        %1349 = vmatprep.subr.mxu0 0.0
        %1350 = vmatpush1.msra.mxu0 %v1278
        %1351 = vmatprep.subr.mxu0 0.0
        %1352 = vmatpush1.msra.mxu0 %v1277
        %1353 = vmatprep.subr.mxu0 0.0
        %1354 = vmatpush1.msra.mxu0 %v1276
        %1355 = vmatprep.subr.mxu0 0.0
        %1356 = vmatpush1.msra.mxu0 %v1275
        %1357 = vmatprep.subr.mxu0 0.0
        %1358 = vmatpush1.msra.mxu0 %v1274
        %1359 = vmatprep.subr.mxu0 0.0
        %1360 = vmatpush1.msra.mxu0 %v1273
        %1361 = vmatprep.subr.mxu0 0.0
        %1362 = vmatpush1.msra.mxu0 %v1272
        %1363 = vmatprep.subr.mxu0 0.0
        %1364 = vmatpush1.msra.mxu0 %v1271
        %1365 = vmatprep.subr.mxu0 0.0
        %1366 = vmatpush1.msra.mxu0 %v1270
        %1367 = vmatprep.subr.mxu0 0.0
        %1368 = vmatpush1.msra.mxu0 %v1269
        %1369 = vmatprep.subr.mxu0 0.0
        %1370 = vmatpush1.msra.mxu0 %v1268
        %1371 = vmatprep.subr.mxu0 0.0
        %1372 = vmatpush1.msra.mxu0 %v1267
        %1373 = vmatprep.subr.mxu0 0.0
        %1374 = vmatpush1.msra.mxu0 %v1266
        %1375 = vmatprep.subr.mxu0 0.0
        %1376 = vmatpush1.msra.mxu0 %v1265
        %1377 = vmatprep.subr.mxu0 0.0
        %1378 = vmatpush1.msra.mxu0 %v1264
        %1379 = vmatprep.subr.mxu0 0.0
        %1380 = vmatpush1.msra.mxu0 %v1263
        %1381 = vmatprep.subr.mxu0 0.0
        %1382 = vmatpush2.msra.mxu0 0.0
        %1383 = vmatprep.subr.mxu0 0.0
        %1384 = vmatpush2.msra.mxu0 0.0
        %1385 = vmatprep.subr.mxu0 0.0
        %1386 = vmatpush2.msra.mxu0 0.0
        %1387 = vmatprep.subr.mxu0 0.0
        %1388 = vmatpush2.msra.mxu0 0.0
        %1389 = vmatprep.subr.mxu0 0.0
        %1390 = vmatpush2.msra.mxu0 0.0
        %1391 = vmatprep.subr.mxu0 0.0
        %1392 = vmatpush2.msra.mxu0 0.0
        %1393 = vmatprep.subr.mxu0 0.0
        %1394 = vmatpush2.msra.mxu0 0.0
        %1395 = vmatprep.subr.mxu0 0.0
        %1396 = vmatpush2.msra.mxu0 0.0
        %1397 = vmatprep.subr.mxu0 0.0
        %1398 = vmatpush2.msra.mxu0 0.0
        %1399 = vmatprep.subr.mxu0 0.0
        %1400 = vmatpush2.msra.mxu0 0.0
        %1401 = vmatprep.subr.mxu0 0.0
        %1402 = vmatpush2.msra.mxu0 0.0
        %1403 = vmatprep.subr.mxu0 0.0
        %1404 = vmatpush2.msra.mxu0 0.0
        %1405 = vmatprep.subr.mxu0 0.0
        %1406 = vmatpush2.msra.mxu0 0.0
        %1407 = vmatprep.subr.mxu0 0.0
        %1408 = vmatpush2.msra.mxu0 0.0
        %1409 = vmatprep.subr.mxu0 0.0
        %1410 = vmatpush2.msra.mxu0 0.0
        %1411 = vmatprep.subr.mxu0 0.0
        %1412 = vmatpush2.msra.mxu0 0.0
        %1413 = vmatprep.mubr.f32.mxu0 0.0
        %1414 = vmatmul.mubr.f32.gmra.mxu0 %v1230
        %v1415 = vpop.f32.mrf.mxu0
        %v1416 = vadd.f32 %v1346, %v1415
        %v1417 = vpop.f32.mrf.mxu0
        %1418 = vdwg.mxu0
        %v1419 = vadd.f32 %v1225, %v1416
        %vm1420 = vcmp.ge.f32.partialorder %v1419, 0.0
        %v1421 = vmul.f32 %v1419, 0.01
        %v1422 = vsel %vm1420, %v1419, %v1421
        %v1423 = vld [vmem:[%s6] sm:$0xff]
        %v1424 = vld [vmem:[%s6 + $0x8] sm:$0xff]
        %v1425 = vld [vmem:[%s6 + $0x10] sm:$0xff]
        %v1426 = vld [vmem:[%s6 + $0x18] sm:$0xff]
        %v1427 = vld [vmem:[%s6 + $0x20] sm:$0xff]
        %v1428 = vld [vmem:[%s6 + $0x28] sm:$0xff]
        %v1429 = vld [vmem:[%s6 + $0x30] sm:$0xff]
        %v1430 = vld [vmem:[%s6 + $0x38] sm:$0xff]
        %v1431 = vld [vmem:[%s6 + $0x40] sm:$0xff]
        %v1432 = vld [vmem:[%s6 + $0x48] sm:$0xff]
        %v1433 = vld [vmem:[%s6 + $0x50] sm:$0xff]
        %v1434 = vld [vmem:[%s6 + $0x58] sm:$0xff]
        %v1435 = vld [vmem:[%s6 + $0x60] sm:$0xff]
        %v1436 = vld [vmem:[%s6 + $0x68] sm:$0xff]
        %v1437 = vld [vmem:[%s6 + $0x70] sm:$0xff]
        %v1438 = vld [vmem:[%s6 + $0x78] sm:$0xff]
        %1439 = vmatprep.subr.mxu0 0.0
        %1440 = vmatpush1.msra.mxu0 %v1438
        %1441 = vmatprep.subr.mxu0 0.0
        %1442 = vmatpush1.msra.mxu0 %v1437
        %1443 = vmatprep.subr.mxu0 0.0
        %1444 = vmatpush1.msra.mxu0 %v1436
        %1445 = vmatprep.subr.mxu0 0.0
        %1446 = vmatpush1.msra.mxu0 %v1435
        %1447 = vmatprep.subr.mxu0 0.0
        %1448 = vmatpush1.msra.mxu0 %v1434
        %1449 = vmatprep.subr.mxu0 0.0
        %1450 = vmatpush1.msra.mxu0 %v1433
        %1451 = vmatprep.subr.mxu0 0.0
        %1452 = vmatpush1.msra.mxu0 %v1432
        %1453 = vmatprep.subr.mxu0 0.0
        %1454 = vmatpush1.msra.mxu0 %v1431
        %1455 = vmatprep.subr.mxu0 0.0
        %1456 = vmatpush1.msra.mxu0 %v1430
        %1457 = vmatprep.subr.mxu0 0.0
        %1458 = vmatpush1.msra.mxu0 %v1429
        %1459 = vmatprep.subr.mxu0 0.0
        %1460 = vmatpush1.msra.mxu0 %v1428
        %1461 = vmatprep.subr.mxu0 0.0
        %1462 = vmatpush1.msra.mxu0 %v1427
        %1463 = vmatprep.subr.mxu0 0.0
        %1464 = vmatpush1.msra.mxu0 %v1426
        %1465 = vmatprep.subr.mxu0 0.0
        %1466 = vmatpush1.msra.mxu0 %v1425
        %1467 = vmatprep.subr.mxu0 0.0
        %1468 = vmatpush1.msra.mxu0 %v1424
        %1469 = vmatprep.subr.mxu0 0.0
        %1470 = vmatpush1.msra.mxu0 %v1423
        %1471 = vmatprep.subr.mxu0 0.0
        %1472 = vmatpush2.msra.mxu0 0.0
        %1473 = vmatprep.subr.mxu0 0.0
        %1474 = vmatpush2.msra.mxu0 0.0
        %1475 = vmatprep.subr.mxu0 0.0
        %1476 = vmatpush2.msra.mxu0 0.0
        %1477 = vmatprep.subr.mxu0 0.0
        %1478 = vmatpush2.msra.mxu0 0.0
        %1479 = vmatprep.subr.mxu0 0.0
        %1480 = vmatpush2.msra.mxu0 0.0
        %1481 = vmatprep.subr.mxu0 0.0
        %1482 = vmatpush2.msra.mxu0 0.0
        %1483 = vmatprep.subr.mxu0 0.0
        %1484 = vmatpush2.msra.mxu0 0.0
        %1485 = vmatprep.subr.mxu0 0.0
        %1486 = vmatpush2.msra.mxu0 0.0
        %1487 = vmatprep.subr.mxu0 0.0
        %1488 = vmatpush2.msra.mxu0 0.0
        %1489 = vmatprep.subr.mxu0 0.0
        %1490 = vmatpush2.msra.mxu0 0.0
        %1491 = vmatprep.subr.mxu0 0.0
        %1492 = vmatpush2.msra.mxu0 0.0
        %1493 = vmatprep.subr.mxu0 0.0
        %1494 = vmatpush2.msra.mxu0 0.0
        %1495 = vmatprep.subr.mxu0 0.0
        %1496 = vmatpush2.msra.mxu0 0.0
        %1497 = vmatprep.subr.mxu0 0.0
        %1498 = vmatpush2.msra.mxu0 0.0
        %1499 = vmatprep.subr.mxu0 0.0
        %1500 = vmatpush2.msra.mxu0 0.0
        %1501 = vmatprep.subr.mxu0 0.0
        %1502 = vmatpush2.msra.mxu0 0.0
        %1503 = vmatprep.mubr.f32.mxu0 0.0
        %1504 = vmatmul.mubr.f32.gmra.mxu0 %v1422
        %v1505 = vpop.f32.mrf.mxu0
        %v1506 = vadd.f32 0.0, %v1505
        %v1507 = vpop.f32.mrf.mxu0
        %1508 = vdwg.mxu0
        %vm1509 = vcmask 261120
        %1510 = vst.msk [vmem:[%s390] sm:$0xff] %vm1509, %v1506
        %s1511 = sand.u32 %s198, 1
        %s1512 = scalar_lea.sflag [#allocation4], %s1511
        %s1513 = sand.u32 %s198, 1
        %s1514 = smul.addr %s1513, 8
        %s1515 = scalar_lea.vmem [#allocation11], %s1514
        // Predicated region
        $region69: #{tpu_custom_call.1} parent=47 // pred_check
          %p1516 = pneg %p208
        $region70: #{tpu_custom_call.1} parent=47 // pred_check_branch
          %1518 = sbr.rel (%p1516) target = $region72
        $region71: #{tpu_custom_call.1} parent=47 // pred_region
          %s1520 = ssub.s32 128, 128
          %1521 = vsyncadd %s1512, %s1520
          %s1522 = smul.addr %s28, 128
          %s1523 = scalar_lea.hbm %s7, %s1522
          %s1525 = sshll.u32 %s1515, 4
          %s1526 = int_to_ptr.vmem [resolvable:$true] %s1525
          %1528 = dma.vmem_to_hbm [thread:$0]  %s1526, 128, %s1523, %s1512
        $region72: #{tpu_custom_call.1} parent=47 // pred_fallthru
          _
      $region48: #{tpu_custom_call.1} parent=5 // pred_fallthru
        _
      %p1529 = scmp.le.s32.totalorder 2, %s23
      // Predicated region
      $region73: #{tpu_custom_call.1} parent=5 // pred_check
        %p1530 = pneg %p1529
      $region74: #{tpu_custom_call.1} parent=5 // pred_check_branch
        %1532 = sbr.rel (%p1530) target = $region76
      $region75: #{tpu_custom_call.1} parent=5 // pred_region
        %s1533 = ssub.s32 %s23, 2
        // Predicated region
        $region77: #{tpu_custom_call.1} parent=75 // pred_check
          %p1534 = pneg %p214
        $region78: #{tpu_custom_call.1} parent=75 // pred_check_branch
          %1536 = sbr.rel (%p1534) target = $region80
        $region79: #{tpu_custom_call.1} parent=75 // pred_region
          %s1537 = sand.u32 %s199, 1
          %s1538 = scalar_lea.sflag [#allocation4], %s1537
          %s1539 = sand.u32 %s199, 1
          %s1540 = smul.addr %s1539, 8
          %s1541 = scalar_lea.vmem [#allocation11], %s1540
          %1542 = dma.done %s1538, 128
        $region80: #{tpu_custom_call.1} parent=75 // pred_fallthru
          _
      $region76: #{tpu_custom_call.1} parent=5 // pred_fallthru
        _
    $region6: #{tpu_custom_call.1} parent=1 // loop_footer
      %s27 = sadd.s32 1, %s23
    $region7: #{tpu_custom_call.1} parent=1 // loop_footer_branch
      %22 = sbr.rel target = $region3
    $region8: #{tpu_custom_call.1} parent=1 // loop_exit
      _
    %1543 = vsyncpa [#allocation3], 1
    %s1544 = scalar_lea.sflag [#allocation3], 1
    %1545 = vsyncpa %s1544, 1
    %1546 = vsyncpa [#allocation6], 1
    %s1547 = scalar_lea.sflag [#allocation6], 1
    %1548 = vsyncpa %s1547, 1
    %1549 = vsyncpa [#allocation9], 1
    %1550 = vsyncpa [#allocation4], 1
    %s1551 = scalar_lea.sflag [#allocation4], 1
    %1552 = vsyncpa %s1551, 1

</llo_original>
